<compile_context>
chip_gen: v7x
topology: tpu7x:2x2x1
jax: 0.10.0
libtpu: 0.0.40
codegen_flags: <defaults>
</compile_context>

<pallas_src>
import functools

import jax
import jax.numpy as jnp
from jax import lax
from jax.experimental import pallas as pl
from jax.experimental.pallas import tpu as pltpu


def _round_up(x, m):
    return ((x + m - 1) // m) * m


# ----------------------------------------------------------------------------
# Pallas kernel: LSTM recurrence over ts timesteps per grid iteration.
# Inputs:  gates_x block (ts, bt, 4*Hp)  -- precomputed x @ W_ih^T + bias
#          W_hh^T        (Hp, 4*Hp)      -- resident across the grid
# Outputs: out block (ts, bt, Hp), hT/cT (bt, Hp) written on the last step.
# (h, c) carried in vregs inside the ts-loop; VMEM scratch written once/block.
# ----------------------------------------------------------------------------
def _lstm_recurrence_kernel(gx_ref, whh_ref, out_ref, hT_ref, cT_ref,
                            h_scr, c_scr, *, ts, hp, rem):
    s = pl.program_id(1)                 # time-block index (axis 0 = batch shard)
    n_t = pl.num_programs(1)

    @pl.when(s == 0)
    def _():
        h_scr[...] = jnp.zeros_like(h_scr)
        c_scr[...] = jnp.zeros_like(c_scr)

    carry0 = (h_scr[...], c_scr[...])

    def step(i, carry):
        h, c = carry
        # gates = gates_x[t] + h @ W_hh^T   (bias folded into gates_x)
        gates = gx_ref[i] + jnp.dot(h, whh_ref[...],
                                    preferred_element_type=jnp.float32)
        i_g = jax.nn.sigmoid(gates[:, 0 * hp:1 * hp])
        f_g = jax.nn.sigmoid(gates[:, 1 * hp:2 * hp])
        g_g = jnp.tanh(gates[:, 2 * hp:3 * hp])
        o_g = jax.nn.sigmoid(gates[:, 3 * hp:4 * hp])
        c_new = f_g * c + i_g * g_g
        h_new = o_g * jnp.tanh(c_new)
        out_ref[i] = h_new
        return (h_new, c_new)

    if rem == 0:
        # ts divides T: every block is full, no masking anywhere.
        h, c = lax.fori_loop(0, ts, step, carry0, unroll=True)
        h_scr[...] = h
        c_scr[...] = c
    else:
        @pl.when(s != n_t - 1)
        def _():
            h, c = lax.fori_loop(0, ts, step, carry0, unroll=True)
            h_scr[...] = h
            c_scr[...] = c

        @pl.when(s == n_t - 1)
        def _():
            # Final partial block: run exactly `rem` steps (static), no mask.
            h, c = lax.fori_loop(0, rem, step, carry0, unroll=True)
            h_scr[...] = h
            c_scr[...] = c

    @pl.when(s == n_t - 1)
    def _():
        hT_ref[...] = h_scr[...]
        cT_ref[...] = c_scr[...]


def lstm_layer(x_tbe, wih_t, whh_t, bias, h_true, *, ts=32,
               num_batch_shards=1):
    """One LSTM layer with zero initial state.

    x_tbe : (T, B, IN) float32, time-major
    wih_t : (IN, 4*Hp)  padded & transposed input-projection weight
    whh_t : (Hp, 4*Hp)  padded & transposed recurrent weight
    bias  : (4*Hp,)     padded combined bias (b_ih + b_hh)
    h_true: true (unpadded) hidden size H
    returns out (T, B, H), hT (B, H), cT (B, H)
    """
    T, B, IN = x_tbe.shape
    Hp = whh_t.shape[0]
    H = h_true

    Bp = max(8, _round_up(B, 8))            # sublane-aligned batch
    ts = max(1, min(ts, T))                 # timesteps per grid iteration
    nblocks = -(-T // ts)
    rem = T % ts
    Tp = nblocks * ts

    # Optional batch-shard axis (v7x megacore); shards stay sublane-aligned.
    nb = num_batch_shards if (num_batch_shards > 1
                              and Bp % (8 * num_batch_shards) == 0) else 1
    bt = Bp // nb

    # --- hoisted input projection, built directly in padded layout ----------
    x_p = jnp.zeros((Tp, Bp, IN), jnp.float32).at[:T, :B, :].set(
        x_tbe.astype(jnp.float32))
    gx = jnp.einsum('tbi,ig->tbg', x_p, wih_t) + bias[None, None, :]

    kernel = functools.partial(_lstm_recurrence_kernel, ts=ts, hp=Hp, rem=rem)

    # Explicit VMEM budget from the actual buffer sizes (double-buffered I/O).
    gx_blk = ts * bt * 4 * Hp * 4
    out_blk = ts * bt * Hp * 4
    whh_b = Hp * 4 * Hp * 4
    hc_b = bt * Hp * 4
    total = 2 * gx_blk + 2 * whh_b + 2 * out_blk + 4 * hc_b + 2 * hc_b
    vmem_limit = int(min(64 * 1024 * 1024, max(32 * 1024 * 1024, 2 * total)))

    grid_spec = pltpu.PrefetchScalarGridSpec(
        num_scalar_prefetch=0,
        grid=(nb, nblocks),
        in_specs=[
            pl.BlockSpec((ts, bt, 4 * Hp), lambda b, s: (s, b, 0)),  # gates_x
            pl.BlockSpec((Hp, 4 * Hp), lambda b, s: (0, 0)),         # W_hh^T
        ],
        out_specs=[
            pl.BlockSpec((ts, bt, Hp), lambda b, s: (s, b, 0)),      # out
            pl.BlockSpec((bt, Hp), lambda b, s: (b, 0)),             # hT
            pl.BlockSpec((bt, Hp), lambda b, s: (b, 0)),             # cT
        ],
        scratch_shapes=[
            pltpu.VMEM((bt, Hp), jnp.float32),                       # h carry
            pltpu.VMEM((bt, Hp), jnp.float32),                       # c carry
        ],
    )

    out_p, hT_p, cT_p = pl.pallas_call(
        kernel,
        out_shape=(
            jax.ShapeDtypeStruct((Tp, Bp, Hp), jnp.float32),
            jax.ShapeDtypeStruct((Bp, Hp), jnp.float32),
            jax.ShapeDtypeStruct((Bp, Hp), jnp.float32),
        ),
        grid_spec=grid_spec,
        compiler_params=pltpu.CompilerParams(
            dimension_semantics=("parallel", "arbitrary"),
            vmem_limit_bytes=vmem_limit),
    )(gx, whh_t)

    return out_p[:T, :B, :H], hT_p[:B, :H], cT_p[:B, :H]


# ----------------------------------------------------------------------------
# One-time parameter prep (padding / transpose hoisted out of the forward)
# ----------------------------------------------------------------------------
def init_params(key, vocab_size, embed_size, num_hiddens, num_layers):
    """Deterministic parameter init matching PyTorch shapes."""
    params = {}
    k_emb, key = jax.random.split(key)
    params["embedding"] = jax.random.normal(
        k_emb, (vocab_size, embed_size), jnp.float32)  # nn.Embedding: N(0,1)

    bound = 1.0 / jnp.sqrt(jnp.float32(num_hiddens))
    layers = []
    for layer in range(num_layers):
        in_sz = embed_size if layer == 0 else num_hiddens
        key, k1, k2, k3, k4 = jax.random.split(key, 5)
        layers.append(dict(
            w_ih=jax.random.uniform(k1, (4 * num_hiddens, in_sz),
                                    jnp.float32, -bound, bound),
            w_hh=jax.random.uniform(k2, (4 * num_hiddens, num_hiddens),
                                    jnp.float32, -bound, bound),
            b_ih=jax.random.uniform(k3, (4 * num_hiddens,),
                                    jnp.float32, -bound, bound),
            b_hh=jax.random.uniform(k4, (4 * num_hiddens,),
                                    jnp.float32, -bound, bound),
        ))
    params["lstm"] = layers
    return params


def prepare_params(params):
    """Pad each gate's width to a lane multiple and pre-transpose weights.

    Runs once, outside the jitted forward (removes per-call weight padding
    traffic).  Layouts: wih_t (IN, 4Hp), whh_t (Hp, 4Hp), bias (4Hp,).
    """
    prepared = {"embedding": jnp.asarray(params["embedding"], jnp.float32),
                "layers": []}
    for p in params["lstm"]:
        w_ih = jnp.asarray(p["w_ih"], jnp.float32)      # (4H, IN)
        w_hh = jnp.asarray(p["w_hh"], jnp.float32)      # (4H, H)
        b = jnp.asarray(p["b_ih"], jnp.float32) + jnp.asarray(p["b_hh"],
                                                              jnp.float32)
        four_h, in_sz = w_ih.shape
        H = four_h // 4
        Hp = max(128, _round_up(H, 128))

        w_ih4 = w_ih.reshape(4, H, in_sz)
        w_hh4 = w_hh.reshape(4, H, H)
        b4 = b.reshape(4, H)

        w_ih_p = jnp.zeros((4, Hp, in_sz), jnp.float32).at[:, :H, :].set(w_ih4)
        w_hh_p = jnp.zeros((4, Hp, Hp), jnp.float32).at[:, :H, :H].set(w_hh4)
        b_p = jnp.zeros((4, Hp), jnp.float32).at[:, :H].set(b4)

        prepared["layers"].append(dict(
            wih_t=w_ih_p.reshape(4 * Hp, in_sz).T,      # (IN, 4Hp)
            whh_t=w_hh_p.reshape(4 * Hp, Hp).T,         # (Hp, 4Hp)
            bias=b_p.reshape(4 * Hp),
        ))
    return prepared


# ----------------------------------------------------------------------------
# Forward pass: embedding + num_layers LSTM
# ----------------------------------------------------------------------------
@functools.partial(jax.jit, static_argnames=("num_layers", "num_hiddens"))
def seq2seq_forward(prepared, X, num_layers, num_hiddens):
    """X: (batch, seq) int32 token ids.
    Returns out (seq, batch, H), (h, c) each (num_layers, batch, H)."""
    emb = jnp.take(prepared["embedding"], X, axis=0)         # (B, T, E)
    x = jnp.transpose(emb, (1, 0, 2)).astype(jnp.float32)    # (T, B, E)

    hs, cs = [], []
    # dropout=0 between layers (module default), so layers chain directly.
    for layer in range(num_layers):
        p = prepared["layers"][layer]
        x, hT, cT = lstm_layer(x, p["wih_t"], p["whh_t"], p["bias"],
                               num_hiddens)
        hs.append(hT)
        cs.append(cT)

    h = jnp.stack(hs, axis=0)   # (num_layers, B, H)
    c = jnp.stack(cs, axis=0)   # (num_layers, B, H)
    return x, (h, c)


# ----------------------------------------------------------------------------
# Pure-JAX reference (for sanity check)
# ----------------------------------------------------------------------------
def _reference(params, X, num_layers):
    emb = jnp.take(params["embedding"], X, axis=0)
    x = jnp.transpose(emb, (1, 0, 2)).astype(jnp.float32)
    T, B, _ = x.shape
    H = params["lstm"][0]["w_hh"].shape[1]
    hs, cs = [], []
    for layer in range(num_layers):
        p = params["lstm"][layer]
        h = jnp.zeros((B, H), jnp.float32)
        c = jnp.zeros((B, H), jnp.float32)
        outs = []
        for t in range(T):
            gates = (x[t] @ p["w_ih"].T + h @ p["w_hh"].T
                     + p["b_ih"] + p["b_hh"])
            i = jax.nn.sigmoid(gates[:, 0 * H:1 * H])
            f = jax.nn.sigmoid(gates[:, 1 * H:2 * H])
            g = jnp.tanh(gates[:, 2 * H:3 * H])
            o = jax.nn.sigmoid(gates[:, 3 * H:4 * H])
            c = f * c + i * g
            h = o * jnp.tanh(c)
            outs.append(h)
        x = jnp.stack(outs, axis=0)
        hs.append(h)
        cs.append(c)
    return x, (jnp.stack(hs), jnp.stack(cs))


if __name__ == "__main__":
    vocab_size, embed_size, num_hiddens, num_layers = 20, 16, 32, 2
    batch, seq = 4, 8

    key = jax.random.PRNGKey(0)
    k_params, k_tokens = jax.random.split(key)
    params = init_params(k_params, vocab_size, embed_size, num_hiddens,
                         num_layers)
    X = jax.random.randint(k_tokens, (batch, seq), 0, vocab_size, jnp.int32)

    prepared = prepare_params(params)   # one-time weight prep (outside jit)

    out, (h, c) = seq2seq_forward(prepared, X, num_layers, num_hiddens)
    out = jax.block_until_ready(out)
    h = jax.block_until_ready(h)
    c = jax.block_until_ready(c)

    assert out.shape == (seq, batch, num_hiddens)
    assert h.shape == (num_layers, batch, num_hiddens)
    assert c.shape == (num_layers, batch, num_hiddens)

    ref_out, (ref_h, ref_c) = _reference(params, X, num_layers)
    assert jnp.allclose(out, ref_out, atol=2e-5), "out mismatch"
    assert jnp.allclose(h, ref_h, atol=2e-5), "h mismatch"
    assert jnp.allclose(c, ref_c, atol=2e-5), "c mismatch"

    print("KERNEL_OK")
</pallas_src>

<mosaic_0001>
module attributes {stable_mosaic.version = 11 : i64} {
  func.func @_lstm_recurrence_kernel(%arg0: i32, %arg1: i32, %arg2: memref<8x8x512xf32, #tpu.memory_space<vmem>>, %arg3: memref<128x512xf32, #tpu.memory_space<vmem>>, %arg4: memref<8x8x128xf32, #tpu.memory_space<vmem>>, %arg5: memref<8x128xf32, #tpu.memory_space<vmem>>, %arg6: memref<8x128xf32, #tpu.memory_space<vmem>>, %arg7: memref<8x128xf32, #tpu.memory_space<vmem>>, %arg8: memref<8x128xf32, #tpu.memory_space<vmem>>) attributes {dimension_semantics = [#tpu.dimension_semantics<parallel>, #tpu.dimension_semantics<arbitrary>], iteration_bounds = array<i64: 1, 1>, scalar_prefetch = 0 : i64, scratch_operands = 2 : i64, tpu.core_type = #tpu.core_type<tc>, window_params = [{transform_indices = @transform_0, window_bounds = array<i64: 8, 8, 512>}, {pipeline_mode = #tpu.pipeline_mode<synchronous>, transform_indices = @transform_1, window_bounds = array<i64: 128, 512>}, {transform_indices = @transform_2, window_bounds = array<i64: 8, 8, 128>}, {transform_indices = @transform_3, window_bounds = array<i64: 8, 128>}, {transform_indices = @transform_4, window_bounds = array<i64: 8, 128>}]} {
    %c0_i32 = arith.constant 0 : i32
    %0 = arith.cmpi eq, %arg1, %c0_i32 : i32
    %1 = arith.extui %0 : i1 to i32
    %c0_i32_0 = arith.constant 0 : i32
    %2 = arith.cmpi ne, %1, %c0_i32_0 : i32
    scf.if %2 {
      %cst_90 = arith.constant 0.000000e+00 : f32
      %290 = vector.broadcast %cst_90 : f32 to vector<8x128xf32>
      %c0_91 = arith.constant 0 : index
      %c0_92 = arith.constant 0 : index
      %291 = vector.load %arg7[%c0_91, %c0_92] : memref<8x128xf32, #tpu.memory_space<vmem>>, vector<8x128xf32>
      tpu.vector_store %arg7[%c0_91, %c0_92], %290 {strides = array<i32>} : memref<8x128xf32, #tpu.memory_space<vmem>>, vector<8x128xf32>,
      %cst_93 = arith.constant 0.000000e+00 : f32
      %292 = vector.broadcast %cst_93 : f32 to vector<8x128xf32>
      %c0_94 = arith.constant 0 : index
      %c0_95 = arith.constant 0 : index
      %293 = vector.load %arg8[%c0_94, %c0_95] : memref<8x128xf32, #tpu.memory_space<vmem>>, vector<8x128xf32>
      tpu.vector_store %arg8[%c0_94, %c0_95], %292 {strides = array<i32>} : memref<8x128xf32, #tpu.memory_space<vmem>>, vector<8x128xf32>,
    } else {
    }
    %c0 = arith.constant 0 : index
    %c0_1 = arith.constant 0 : index
    %3 = vector.load %arg7[%c0, %c0_1] : memref<8x128xf32, #tpu.memory_space<vmem>>, vector<8x128xf32>
    %c0_2 = arith.constant 0 : index
    %c0_3 = arith.constant 0 : index
    %4 = vector.load %arg8[%c0_2, %c0_3] : memref<8x128xf32, #tpu.memory_space<vmem>>, vector<8x128xf32>
    %c0_i32_4 = arith.constant 0 : i32
    %5 = arith.index_cast %c0_i32_4 : i32 to index
    %c0_5 = arith.constant 0 : index
    %c0_6 = arith.constant 0 : index
    %6 = vector.load %arg2[%5, %c0_5, %c0_6] : memref<8x8x512xf32, #tpu.memory_space<vmem>>, vector<1x8x512xf32>
    %7 = vector.shape_cast %6 : vector<1x8x512xf32> to vector<8x512xf32>
    %c0_7 = arith.constant 0 : index
    %c0_8 = arith.constant 0 : index
    %8 = vector.load %arg3[%c0_7, %c0_8] : memref<128x512xf32, #tpu.memory_space<vmem>>, vector<128x512xf32>
    %cst = arith.constant dense<0.000000e+00> : vector<8x512xf32>
    %9 = tpu.matmul %3, %8, %cst {dimension_numbers = #tpu.dot_dimension_numbers<[1], [0], [0], [1], [0, 0, 1, 1], [], []>} : vector<8x128xf32>, vector<128x512xf32>, vector<8x512xf32> -> vector<8x512xf32>
    %10 = arith.addf %7, %9 : vector<8x512xf32>
    %11 = vector.extract_strided_slice %10 {offsets = [0, 0], sizes = [8, 128], strides = [1, 1]} : vector<8x512xf32> to vector<8x128xf32>
    %12 = arith.negf %11 : vector<8x128xf32>
    %13 = math.exp %12 : vector<8x128xf32>
    %cst_9 = arith.constant 1.000000e+00 : f32
    %14 = vector.broadcast %cst_9 : f32 to vector<8x128xf32>
    %15 = arith.addf %14, %13 : vector<8x128xf32>
    %16 = arith.divf %14, %15 : vector<8x128xf32>
    %17 = vector.extract_strided_slice %10 {offsets = [0, 128], sizes = [8, 128], strides = [1, 1]} : vector<8x512xf32> to vector<8x128xf32>
    %18 = arith.negf %17 : vector<8x128xf32>
    %19 = math.exp %18 : vector<8x128xf32>
    %cst_10 = arith.constant 1.000000e+00 : f32
    %20 = vector.broadcast %cst_10 : f32 to vector<8x128xf32>
    %21 = arith.addf %20, %19 : vector<8x128xf32>
    %22 = arith.divf %20, %21 : vector<8x128xf32>
    %23 = vector.extract_strided_slice %10 {offsets = [0, 256], sizes = [8, 128], strides = [1, 1]} : vector<8x512xf32> to vector<8x128xf32>
    %24 = math.tanh %23 : vector<8x128xf32>
    %25 = vector.extract_strided_slice %10 {offsets = [0, 384], sizes = [8, 128], strides = [1, 1]} : vector<8x512xf32> to vector<8x128xf32>
    %26 = arith.negf %25 : vector<8x128xf32>
    %27 = math.exp %26 : vector<8x128xf32>
    %cst_11 = arith.constant 1.000000e+00 : f32
    %28 = vector.broadcast %cst_11 : f32 to vector<8x128xf32>
    %29 = arith.addf %28, %27 : vector<8x128xf32>
    %30 = arith.divf %28, %29 : vector<8x128xf32>
    %31 = arith.mulf %22, %4 : vector<8x128xf32>
    %32 = arith.mulf %16, %24 : vector<8x128xf32>
    %33 = arith.addf %31, %32 : vector<8x128xf32>
    %34 = math.tanh %33 : vector<8x128xf32>
    %35 = arith.mulf %30, %34 : vector<8x128xf32>
    %36 = arith.index_cast %c0_i32_4 : i32 to index
    %c0_12 = arith.constant 0 : index
    %c0_13 = arith.constant 0 : index
    %37 = vector.load %arg4[%36, %c0_12, %c0_13] : memref<8x8x128xf32, #tpu.memory_space<vmem>>, vector<1x8x128xf32>
    %38 = vector.shape_cast %37 : vector<1x8x128xf32> to vector<8x128xf32>
    %39 = vector.shape_cast %35 : vector<8x128xf32> to vector<1x8x128xf32>
    tpu.vector_store %arg4[%36, %c0_12, %c0_13], %39 {strides = array<i32>} : memref<8x8x128xf32, #tpu.memory_space<vmem>>, vector<1x8x128xf32>,
    %c1_i32 = arith.constant 1 : i32
    %40 = arith.index_cast %c1_i32 : i32 to index
    %c0_14 = arith.constant 0 : index
    %c0_15 = arith.constant 0 : index
    %41 = vector.load %arg2[%40, %c0_14, %c0_15] : memref<8x8x512xf32, #tpu.memory_space<vmem>>, vector<1x8x512xf32>
    %42 = vector.shape_cast %41 : vector<1x8x512xf32> to vector<8x512xf32>
    %c0_16 = arith.constant 0 : index
    %c0_17 = arith.constant 0 : index
    %43 = vector.load %arg3[%c0_16, %c0_17] : memref<128x512xf32, #tpu.memory_space<vmem>>, vector<128x512xf32>
    %cst_18 = arith.constant dense<0.000000e+00> : vector<8x512xf32>
    %44 = tpu.matmul %35, %43, %cst_18 {dimension_numbers = #tpu.dot_dimension_numbers<[1], [0], [0], [1], [0, 0, 1, 1], [], []>} : vector<8x128xf32>, vector<128x512xf32>, vector<8x512xf32> -> vector<8x512xf32>
    %45 = arith.addf %42, %44 : vector<8x512xf32>
    %46 = vector.extract_strided_slice %45 {offsets = [0, 0], sizes = [8, 128], strides = [1, 1]} : vector<8x512xf32> to vector<8x128xf32>
    %47 = arith.negf %46 : vector<8x128xf32>
    %48 = math.exp %47 : vector<8x128xf32>
    %cst_19 = arith.constant 1.000000e+00 : f32
    %49 = vector.broadcast %cst_19 : f32 to vector<8x128xf32>
    %50 = arith.addf %49, %48 : vector<8x128xf32>
    %51 = arith.divf %49, %50 : vector<8x128xf32>
    %52 = vector.extract_strided_slice %45 {offsets = [0, 128], sizes = [8, 128], strides = [1, 1]} : vector<8x512xf32> to vector<8x128xf32>
    %53 = arith.negf %52 : vector<8x128xf32>
    %54 = math.exp %53 : vector<8x128xf32>
    %cst_20 = arith.constant 1.000000e+00 : f32
    %55 = vector.broadcast %cst_20 : f32 to vector<8x128xf32>
    %56 = arith.addf %55, %54 : vector<8x128xf32>
    %57 = arith.divf %55, %56 : vector<8x128xf32>
    %58 = vector.extract_strided_slice %45 {offsets = [0, 256], sizes = [8, 128], strides = [1, 1]} : vector<8x512xf32> to vector<8x128xf32>
    %59 = math.tanh %58 : vector<8x128xf32>
    %60 = vector.extract_strided_slice %45 {offsets = [0, 384], sizes = [8, 128], strides = [1, 1]} : vector<8x512xf32> to vector<8x128xf32>
    %61 = arith.negf %60 : vector<8x128xf32>
    %62 = math.exp %61 : vector<8x128xf32>
    %cst_21 = arith.constant 1.000000e+00 : f32
    %63 = vector.broadcast %cst_21 : f32 to vector<8x128xf32>
    %64 = arith.addf %63, %62 : vector<8x128xf32>
    %65 = arith.divf %63, %64 : vector<8x128xf32>
    %66 = arith.mulf %57, %33 : vector<8x128xf32>
    %67 = arith.mulf %51, %59 : vector<8x128xf32>
    %68 = arith.addf %66, %67 : vector<8x128xf32>
    %69 = math.tanh %68 : vector<8x128xf32>
    %70 = arith.mulf %65, %69 : vector<8x128xf32>
    %71 = arith.index_cast %c1_i32 : i32 to index
    %c0_22 = arith.constant 0 : index
    %c0_23 = arith.constant 0 : index
    %72 = vector.load %arg4[%71, %c0_22, %c0_23] : memref<8x8x128xf32, #tpu.memory_space<vmem>>, vector<1x8x128xf32>
    %73 = vector.shape_cast %72 : vector<1x8x128xf32> to vector<8x128xf32>
    %74 = vector.shape_cast %70 : vector<8x128xf32> to vector<1x8x128xf32>
    tpu.vector_store %arg4[%71, %c0_22, %c0_23], %74 {strides = array<i32>} : memref<8x8x128xf32, #tpu.memory_space<vmem>>, vector<1x8x128xf32>,
    %c2_i32 = arith.constant 2 : i32
    %75 = arith.index_cast %c2_i32 : i32 to index
    %c0_24 = arith.constant 0 : index
    %c0_25 = arith.constant 0 : index
    %76 = vector.load %arg2[%75, %c0_24, %c0_25] : memref<8x8x512xf32, #tpu.memory_space<vmem>>, vector<1x8x512xf32>
    %77 = vector.shape_cast %76 : vector<1x8x512xf32> to vector<8x512xf32>
    %c0_26 = arith.constant 0 : index
    %c0_27 = arith.constant 0 : index
    %78 = vector.load %arg3[%c0_26, %c0_27] : memref<128x512xf32, #tpu.memory_space<vmem>>, vector<128x512xf32>
    %cst_28 = arith.constant dense<0.000000e+00> : vector<8x512xf32>
    %79 = tpu.matmul %70, %78, %cst_28 {dimension_numbers = #tpu.dot_dimension_numbers<[1], [0], [0], [1], [0, 0, 1, 1], [], []>} : vector<8x128xf32>, vector<128x512xf32>, vector<8x512xf32> -> vector<8x512xf32>
    %80 = arith.addf %77, %79 : vector<8x512xf32>
    %81 = vector.extract_strided_slice %80 {offsets = [0, 0], sizes = [8, 128], strides = [1, 1]} : vector<8x512xf32> to vector<8x128xf32>
    %82 = arith.negf %81 : vector<8x128xf32>
    %83 = math.exp %82 : vector<8x128xf32>
    %cst_29 = arith.constant 1.000000e+00 : f32
    %84 = vector.broadcast %cst_29 : f32 to vector<8x128xf32>
    %85 = arith.addf %84, %83 : vector<8x128xf32>
    %86 = arith.divf %84, %85 : vector<8x128xf32>
    %87 = vector.extract_strided_slice %80 {offsets = [0, 128], sizes = [8, 128], strides = [1, 1]} : vector<8x512xf32> to vector<8x128xf32>
    %88 = arith.negf %87 : vector<8x128xf32>
    %89 = math.exp %88 : vector<8x128xf32>
    %cst_30 = arith.constant 1.000000e+00 : f32
    %90 = vector.broadcast %cst_30 : f32 to vector<8x128xf32>
    %91 = arith.addf %90, %89 : vector<8x128xf32>
    %92 = arith.divf %90, %91 : vector<8x128xf32>
    %93 = vector.extract_strided_slice %80 {offsets = [0, 256], sizes = [8, 128], strides = [1, 1]} : vector<8x512xf32> to vector<8x128xf32>
    %94 = math.tanh %93 : vector<8x128xf32>
    %95 = vector.extract_strided_slice %80 {offsets = [0, 384], sizes = [8, 128], strides = [1, 1]} : vector<8x512xf32> to vector<8x128xf32>
    %96 = arith.negf %95 : vector<8x128xf32>
    %97 = math.exp %96 : vector<8x128xf32>
    %cst_31 = arith.constant 1.000000e+00 : f32
    %98 = vector.broadcast %cst_31 : f32 to vector<8x128xf32>
    %99 = arith.addf %98, %97 : vector<8x128xf32>
    %100 = arith.divf %98, %99 : vector<8x128xf32>
    %101 = arith.mulf %92, %68 : vector<8x128xf32>
    %102 = arith.mulf %86, %94 : vector<8x128xf32>
    %103 = arith.addf %101, %102 : vector<8x128xf32>
    %104 = math.tanh %103 : vector<8x128xf32>
    %105 = arith.mulf %100, %104 : vector<8x128xf32>
    %106 = arith.index_cast %c2_i32 : i32 to index
    %c0_32 = arith.constant 0 : index
    %c0_33 = arith.constant 0 : index
    %107 = vector.load %arg4[%106, %c0_32, %c0_33] : memref<8x8x128xf32, #tpu.memory_space<vmem>>, vector<1x8x128xf32>
    %108 = vector.shape_cast %107 : vector<1x8x128xf32> to vector<8x128xf32>
    %109 = vector.shape_cast %105 : vector<8x128xf32> to vector<1x8x128xf32>
    tpu.vector_store %arg4[%106, %c0_32, %c0_33], %109 {strides = array<i32>} : memref<8x8x128xf32, #tpu.memory_space<vmem>>, vector<1x8x128xf32>,
    %c3_i32 = arith.constant 3 : i32
    %110 = arith.index_cast %c3_i32 : i32 to index
    %c0_34 = arith.constant 0 : index
    %c0_35 = arith.constant 0 : index
    %111 = vector.load %arg2[%110, %c0_34, %c0_35] : memref<8x8x512xf32, #tpu.memory_space<vmem>>, vector<1x8x512xf32>
    %112 = vector.shape_cast %111 : vector<1x8x512xf32> to vector<8x512xf32>
    %c0_36 = arith.constant 0 : index
    %c0_37 = arith.constant 0 : index
    %113 = vector.load %arg3[%c0_36, %c0_37] : memref<128x512xf32, #tpu.memory_space<vmem>>, vector<128x512xf32>
    %cst_38 = arith.constant dense<0.000000e+00> : vector<8x512xf32>
    %114 = tpu.matmul %105, %113, %cst_38 {dimension_numbers = #tpu.dot_dimension_numbers<[1], [0], [0], [1], [0, 0, 1, 1], [], []>} : vector<8x128xf32>, vector<128x512xf32>, vector<8x512xf32> -> vector<8x512xf32>
    %115 = arith.addf %112, %114 : vector<8x512xf32>
    %116 = vector.extract_strided_slice %115 {offsets = [0, 0], sizes = [8, 128], strides = [1, 1]} : vector<8x512xf32> to vector<8x128xf32>
    %117 = arith.negf %116 : vector<8x128xf32>
    %118 = math.exp %117 : vector<8x128xf32>
    %cst_39 = arith.constant 1.000000e+00 : f32
    %119 = vector.broadcast %cst_39 : f32 to vector<8x128xf32>
    %120 = arith.addf %119, %118 : vector<8x128xf32>
    %121 = arith.divf %119, %120 : vector<8x128xf32>
    %122 = vector.extract_strided_slice %115 {offsets = [0, 128], sizes = [8, 128], strides = [1, 1]} : vector<8x512xf32> to vector<8x128xf32>
    %123 = arith.negf %122 : vector<8x128xf32>
    %124 = math.exp %123 : vector<8x128xf32>
    %cst_40 = arith.constant 1.000000e+00 : f32
    %125 = vector.broadcast %cst_40 : f32 to vector<8x128xf32>
    %126 = arith.addf %125, %124 : vector<8x128xf32>
    %127 = arith.divf %125, %126 : vector<8x128xf32>
    %128 = vector.extract_strided_slice %115 {offsets = [0, 256], sizes = [8, 128], strides = [1, 1]} : vector<8x512xf32> to vector<8x128xf32>
    %129 = math.tanh %128 : vector<8x128xf32>
    %130 = vector.extract_strided_slice %115 {offsets = [0, 384], sizes = [8, 128], strides = [1, 1]} : vector<8x512xf32> to vector<8x128xf32>
    %131 = arith.negf %130 : vector<8x128xf32>
    %132 = math.exp %131 : vector<8x128xf32>
    %cst_41 = arith.constant 1.000000e+00 : f32
    %133 = vector.broadcast %cst_41 : f32 to vector<8x128xf32>
    %134 = arith.addf %133, %132 : vector<8x128xf32>
    %135 = arith.divf %133, %134 : vector<8x128xf32>
    %136 = arith.mulf %127, %103 : vector<8x128xf32>
    %137 = arith.mulf %121, %129 : vector<8x128xf32>
    %138 = arith.addf %136, %137 : vector<8x128xf32>
    %139 = math.tanh %138 : vector<8x128xf32>
    %140 = arith.mulf %135, %139 : vector<8x128xf32>
    %141 = arith.index_cast %c3_i32 : i32 to index
    %c0_42 = arith.constant 0 : index
    %c0_43 = arith.constant 0 : index
    %142 = vector.load %arg4[%141, %c0_42, %c0_43] : memref<8x8x128xf32, #tpu.memory_space<vmem>>, vector<1x8x128xf32>
    %143 = vector.shape_cast %142 : vector<1x8x128xf32> to vector<8x128xf32>
    %144 = vector.shape_cast %140 : vector<8x128xf32> to vector<1x8x128xf32>
    tpu.vector_store %arg4[%141, %c0_42, %c0_43], %144 {strides = array<i32>} : memref<8x8x128xf32, #tpu.memory_space<vmem>>, vector<1x8x128xf32>,
    %c4_i32 = arith.constant 4 : i32
    %145 = arith.index_cast %c4_i32 : i32 to index
    %c0_44 = arith.constant 0 : index
    %c0_45 = arith.constant 0 : index
    %146 = vector.load %arg2[%145, %c0_44, %c0_45] : memref<8x8x512xf32, #tpu.memory_space<vmem>>, vector<1x8x512xf32>
    %147 = vector.shape_cast %146 : vector<1x8x512xf32> to vector<8x512xf32>
    %c0_46 = arith.constant 0 : index
    %c0_47 = arith.constant 0 : index
    %148 = vector.load %arg3[%c0_46, %c0_47] : memref<128x512xf32, #tpu.memory_space<vmem>>, vector<128x512xf32>
    %cst_48 = arith.constant dense<0.000000e+00> : vector<8x512xf32>
    %149 = tpu.matmul %140, %148, %cst_48 {dimension_numbers = #tpu.dot_dimension_numbers<[1], [0], [0], [1], [0, 0, 1, 1], [], []>} : vector<8x128xf32>, vector<128x512xf32>, vector<8x512xf32> -> vector<8x512xf32>
    %150 = arith.addf %147, %149 : vector<8x512xf32>
    %151 = vector.extract_strided_slice %150 {offsets = [0, 0], sizes = [8, 128], strides = [1, 1]} : vector<8x512xf32> to vector<8x128xf32>
    %152 = arith.negf %151 : vector<8x128xf32>
    %153 = math.exp %152 : vector<8x128xf32>
    %cst_49 = arith.constant 1.000000e+00 : f32
    %154 = vector.broadcast %cst_49 : f32 to vector<8x128xf32>
    %155 = arith.addf %154, %153 : vector<8x128xf32>
    %156 = arith.divf %154, %155 : vector<8x128xf32>
    %157 = vector.extract_strided_slice %150 {offsets = [0, 128], sizes = [8, 128], strides = [1, 1]} : vector<8x512xf32> to vector<8x128xf32>
    %158 = arith.negf %157 : vector<8x128xf32>
    %159 = math.exp %158 : vector<8x128xf32>
    %cst_50 = arith.constant 1.000000e+00 : f32
    %160 = vector.broadcast %cst_50 : f32 to vector<8x128xf32>
    %161 = arith.addf %160, %159 : vector<8x128xf32>
    %162 = arith.divf %160, %161 : vector<8x128xf32>
    %163 = vector.extract_strided_slice %150 {offsets = [0, 256], sizes = [8, 128], strides = [1, 1]} : vector<8x512xf32> to vector<8x128xf32>
    %164 = math.tanh %163 : vector<8x128xf32>
    %165 = vector.extract_strided_slice %150 {offsets = [0, 384], sizes = [8, 128], strides = [1, 1]} : vector<8x512xf32> to vector<8x128xf32>
    %166 = arith.negf %165 : vector<8x128xf32>
    %167 = math.exp %166 : vector<8x128xf32>
    %cst_51 = arith.constant 1.000000e+00 : f32
    %168 = vector.broadcast %cst_51 : f32 to vector<8x128xf32>
    %169 = arith.addf %168, %167 : vector<8x128xf32>
    %170 = arith.divf %168, %169 : vector<8x128xf32>
    %171 = arith.mulf %162, %138 : vector<8x128xf32>
    %172 = arith.mulf %156, %164 : vector<8x128xf32>
    %173 = arith.addf %171, %172 : vector<8x128xf32>
    %174 = math.tanh %173 : vector<8x128xf32>
    %175 = arith.mulf %170, %174 : vector<8x128xf32>
    %176 = arith.index_cast %c4_i32 : i32 to index
    %c0_52 = arith.constant 0 : index
    %c0_53 = arith.constant 0 : index
    %177 = vector.load %arg4[%176, %c0_52, %c0_53] : memref<8x8x128xf32, #tpu.memory_space<vmem>>, vector<1x8x128xf32>
    %178 = vector.shape_cast %177 : vector<1x8x128xf32> to vector<8x128xf32>
    %179 = vector.shape_cast %175 : vector<8x128xf32> to vector<1x8x128xf32>
    tpu.vector_store %arg4[%176, %c0_52, %c0_53], %179 {strides = array<i32>} : memref<8x8x128xf32, #tpu.memory_space<vmem>>, vector<1x8x128xf32>,
    %c5_i32 = arith.constant 5 : i32
    %180 = arith.index_cast %c5_i32 : i32 to index
    %c0_54 = arith.constant 0 : index
    %c0_55 = arith.constant 0 : index
    %181 = vector.load %arg2[%180, %c0_54, %c0_55] : memref<8x8x512xf32, #tpu.memory_space<vmem>>, vector<1x8x512xf32>
    %182 = vector.shape_cast %181 : vector<1x8x512xf32> to vector<8x512xf32>
    %c0_56 = arith.constant 0 : index
    %c0_57 = arith.constant 0 : index
    %183 = vector.load %arg3[%c0_56, %c0_57] : memref<128x512xf32, #tpu.memory_space<vmem>>, vector<128x512xf32>
    %cst_58 = arith.constant dense<0.000000e+00> : vector<8x512xf32>
    %184 = tpu.matmul %175, %183, %cst_58 {dimension_numbers = #tpu.dot_dimension_numbers<[1], [0], [0], [1], [0, 0, 1, 1], [], []>} : vector<8x128xf32>, vector<128x512xf32>, vector<8x512xf32> -> vector<8x512xf32>
    %185 = arith.addf %182, %184 : vector<8x512xf32>
    %186 = vector.extract_strided_slice %185 {offsets = [0, 0], sizes = [8, 128], strides = [1, 1]} : vector<8x512xf32> to vector<8x128xf32>
    %187 = arith.negf %186 : vector<8x128xf32>
    %188 = math.exp %187 : vector<8x128xf32>
    %cst_59 = arith.constant 1.000000e+00 : f32
    %189 = vector.broadcast %cst_59 : f32 to vector<8x128xf32>
    %190 = arith.addf %189, %188 : vector<8x128xf32>
    %191 = arith.divf %189, %190 : vector<8x128xf32>
    %192 = vector.extract_strided_slice %185 {offsets = [0, 128], sizes = [8, 128], strides = [1, 1]} : vector<8x512xf32> to vector<8x128xf32>
    %193 = arith.negf %192 : vector<8x128xf32>
    %194 = math.exp %193 : vector<8x128xf32>
    %cst_60 = arith.constant 1.000000e+00 : f32
    %195 = vector.broadcast %cst_60 : f32 to vector<8x128xf32>
    %196 = arith.addf %195, %194 : vector<8x128xf32>
    %197 = arith.divf %195, %196 : vector<8x128xf32>
    %198 = vector.extract_strided_slice %185 {offsets = [0, 256], sizes = [8, 128], strides = [1, 1]} : vector<8x512xf32> to vector<8x128xf32>
    %199 = math.tanh %198 : vector<8x128xf32>
    %200 = vector.extract_strided_slice %185 {offsets = [0, 384], sizes = [8, 128], strides = [1, 1]} : vector<8x512xf32> to vector<8x128xf32>
    %201 = arith.negf %200 : vector<8x128xf32>
    %202 = math.exp %201 : vector<8x128xf32>
    %cst_61 = arith.constant 1.000000e+00 : f32
    %203 = vector.broadcast %cst_61 : f32 to vector<8x128xf32>
    %204 = arith.addf %203, %202 : vector<8x128xf32>
    %205 = arith.divf %203, %204 : vector<8x128xf32>
    %206 = arith.mulf %197, %173 : vector<8x128xf32>
    %207 = arith.mulf %191, %199 : vector<8x128xf32>
    %208 = arith.addf %206, %207 : vector<8x128xf32>
    %209 = math.tanh %208 : vector<8x128xf32>
    %210 = arith.mulf %205, %209 : vector<8x128xf32>
    %211 = arith.index_cast %c5_i32 : i32 to index
    %c0_62 = arith.constant 0 : index
    %c0_63 = arith.constant 0 : index
    %212 = vector.load %arg4[%211, %c0_62, %c0_63] : memref<8x8x128xf32, #tpu.memory_space<vmem>>, vector<1x8x128xf32>
    %213 = vector.shape_cast %212 : vector<1x8x128xf32> to vector<8x128xf32>
    %214 = vector.shape_cast %210 : vector<8x128xf32> to vector<1x8x128xf32>
    tpu.vector_store %arg4[%211, %c0_62, %c0_63], %214 {strides = array<i32>} : memref<8x8x128xf32, #tpu.memory_space<vmem>>, vector<1x8x128xf32>,
    %c6_i32 = arith.constant 6 : i32
    %215 = arith.index_cast %c6_i32 : i32 to index
    %c0_64 = arith.constant 0 : index
    %c0_65 = arith.constant 0 : index
    %216 = vector.load %arg2[%215, %c0_64, %c0_65] : memref<8x8x512xf32, #tpu.memory_space<vmem>>, vector<1x8x512xf32>
    %217 = vector.shape_cast %216 : vector<1x8x512xf32> to vector<8x512xf32>
    %c0_66 = arith.constant 0 : index
    %c0_67 = arith.constant 0 : index
    %218 = vector.load %arg3[%c0_66, %c0_67] : memref<128x512xf32, #tpu.memory_space<vmem>>, vector<128x512xf32>
    %cst_68 = arith.constant dense<0.000000e+00> : vector<8x512xf32>
    %219 = tpu.matmul %210, %218, %cst_68 {dimension_numbers = #tpu.dot_dimension_numbers<[1], [0], [0], [1], [0, 0, 1, 1], [], []>} : vector<8x128xf32>, vector<128x512xf32>, vector<8x512xf32> -> vector<8x512xf32>
    %220 = arith.addf %217, %219 : vector<8x512xf32>
    %221 = vector.extract_strided_slice %220 {offsets = [0, 0], sizes = [8, 128], strides = [1, 1]} : vector<8x512xf32> to vector<8x128xf32>
    %222 = arith.negf %221 : vector<8x128xf32>
    %223 = math.exp %222 : vector<8x128xf32>
    %cst_69 = arith.constant 1.000000e+00 : f32
    %224 = vector.broadcast %cst_69 : f32 to vector<8x128xf32>
    %225 = arith.addf %224, %223 : vector<8x128xf32>
    %226 = arith.divf %224, %225 : vector<8x128xf32>
    %227 = vector.extract_strided_slice %220 {offsets = [0, 128], sizes = [8, 128], strides = [1, 1]} : vector<8x512xf32> to vector<8x128xf32>
    %228 = arith.negf %227 : vector<8x128xf32>
    %229 = math.exp %228 : vector<8x128xf32>
    %cst_70 = arith.constant 1.000000e+00 : f32
    %230 = vector.broadcast %cst_70 : f32 to vector<8x128xf32>
    %231 = arith.addf %230, %229 : vector<8x128xf32>
    %232 = arith.divf %230, %231 : vector<8x128xf32>
    %233 = vector.extract_strided_slice %220 {offsets = [0, 256], sizes = [8, 128], strides = [1, 1]} : vector<8x512xf32> to vector<8x128xf32>
    %234 = math.tanh %233 : vector<8x128xf32>
    %235 = vector.extract_strided_slice %220 {offsets = [0, 384], sizes = [8, 128], strides = [1, 1]} : vector<8x512xf32> to vector<8x128xf32>
    %236 = arith.negf %235 : vector<8x128xf32>
    %237 = math.exp %236 : vector<8x128xf32>
    %cst_71 = arith.constant 1.000000e+00 : f32
    %238 = vector.broadcast %cst_71 : f32 to vector<8x128xf32>
    %239 = arith.addf %238, %237 : vector<8x128xf32>
    %240 = arith.divf %238, %239 : vector<8x128xf32>
    %241 = arith.mulf %232, %208 : vector<8x128xf32>
    %242 = arith.mulf %226, %234 : vector<8x128xf32>
    %243 = arith.addf %241, %242 : vector<8x128xf32>
    %244 = math.tanh %243 : vector<8x128xf32>
    %245 = arith.mulf %240, %244 : vector<8x128xf32>
    %246 = arith.index_cast %c6_i32 : i32 to index
    %c0_72 = arith.constant 0 : index
    %c0_73 = arith.constant 0 : index
    %247 = vector.load %arg4[%246, %c0_72, %c0_73] : memref<8x8x128xf32, #tpu.memory_space<vmem>>, vector<1x8x128xf32>
    %248 = vector.shape_cast %247 : vector<1x8x128xf32> to vector<8x128xf32>
    %249 = vector.shape_cast %245 : vector<8x128xf32> to vector<1x8x128xf32>
    tpu.vector_store %arg4[%246, %c0_72, %c0_73], %249 {strides = array<i32>} : memref<8x8x128xf32, #tpu.memory_space<vmem>>, vector<1x8x128xf32>,
    %c7_i32 = arith.constant 7 : i32
    %250 = arith.index_cast %c7_i32 : i32 to index
    %c0_74 = arith.constant 0 : index
    %c0_75 = arith.constant 0 : index
    %251 = vector.load %arg2[%250, %c0_74, %c0_75] : memref<8x8x512xf32, #tpu.memory_space<vmem>>, vector<1x8x512xf32>
    %252 = vector.shape_cast %251 : vector<1x8x512xf32> to vector<8x512xf32>
    %c0_76 = arith.constant 0 : index
    %c0_77 = arith.constant 0 : index
    %253 = vector.load %arg3[%c0_76, %c0_77] : memref<128x512xf32, #tpu.memory_space<vmem>>, vector<128x512xf32>
    %cst_78 = arith.constant dense<0.000000e+00> : vector<8x512xf32>
    %254 = tpu.matmul %245, %253, %cst_78 {dimension_numbers = #tpu.dot_dimension_numbers<[1], [0], [0], [1], [0, 0, 1, 1], [], []>} : vector<8x128xf32>, vector<128x512xf32>, vector<8x512xf32> -> vector<8x512xf32>
    %255 = arith.addf %252, %254 : vector<8x512xf32>
    %256 = vector.extract_strided_slice %255 {offsets = [0, 0], sizes = [8, 128], strides = [1, 1]} : vector<8x512xf32> to vector<8x128xf32>
    %257 = arith.negf %256 : vector<8x128xf32>
    %258 = math.exp %257 : vector<8x128xf32>
    %cst_79 = arith.constant 1.000000e+00 : f32
    %259 = vector.broadcast %cst_79 : f32 to vector<8x128xf32>
    %260 = arith.addf %259, %258 : vector<8x128xf32>
    %261 = arith.divf %259, %260 : vector<8x128xf32>
    %262 = vector.extract_strided_slice %255 {offsets = [0, 128], sizes = [8, 128], strides = [1, 1]} : vector<8x512xf32> to vector<8x128xf32>
    %263 = arith.negf %262 : vector<8x128xf32>
    %264 = math.exp %263 : vector<8x128xf32>
    %cst_80 = arith.constant 1.000000e+00 : f32
    %265 = vector.broadcast %cst_80 : f32 to vector<8x128xf32>
    %266 = arith.addf %265, %264 : vector<8x128xf32>
    %267 = arith.divf %265, %266 : vector<8x128xf32>
    %268 = vector.extract_strided_slice %255 {offsets = [0, 256], sizes = [8, 128], strides = [1, 1]} : vector<8x512xf32> to vector<8x128xf32>
    %269 = math.tanh %268 : vector<8x128xf32>
    %270 = vector.extract_strided_slice %255 {offsets = [0, 384], sizes = [8, 128], strides = [1, 1]} : vector<8x512xf32> to vector<8x128xf32>
    %271 = arith.negf %270 : vector<8x128xf32>
    %272 = math.exp %271 : vector<8x128xf32>
    %cst_81 = arith.constant 1.000000e+00 : f32
    %273 = vector.broadcast %cst_81 : f32 to vector<8x128xf32>
    %274 = arith.addf %273, %272 : vector<8x128xf32>
    %275 = arith.divf %273, %274 : vector<8x128xf32>
    %276 = arith.mulf %267, %243 : vector<8x128xf32>
    %277 = arith.mulf %261, %269 : vector<8x128xf32>
    %278 = arith.addf %276, %277 : vector<8x128xf32>
    %279 = math.tanh %278 : vector<8x128xf32>
    %280 = arith.mulf %275, %279 : vector<8x128xf32>
    %281 = arith.index_cast %c7_i32 : i32 to index
    %c0_82 = arith.constant 0 : index
    %c0_83 = arith.constant 0 : index
    %282 = vector.load %arg4[%281, %c0_82, %c0_83] : memref<8x8x128xf32, #tpu.memory_space<vmem>>, vector<1x8x128xf32>
    %283 = vector.shape_cast %282 : vector<1x8x128xf32> to vector<8x128xf32>
    %284 = vector.shape_cast %280 : vector<8x128xf32> to vector<1x8x128xf32>
    tpu.vector_store %arg4[%281, %c0_82, %c0_83], %284 {strides = array<i32>} : memref<8x8x128xf32, #tpu.memory_space<vmem>>, vector<1x8x128xf32>,
    %c8_i32 = arith.constant 8 : i32
    %c0_84 = arith.constant 0 : index
    %c0_85 = arith.constant 0 : index
    %285 = vector.load %arg7[%c0_84, %c0_85] : memref<8x128xf32, #tpu.memory_space<vmem>>, vector<8x128xf32>
    tpu.vector_store %arg7[%c0_84, %c0_85], %280 {strides = array<i32>} : memref<8x128xf32, #tpu.memory_space<vmem>>, vector<8x128xf32>,
    %c0_86 = arith.constant 0 : index
    %c0_87 = arith.constant 0 : index
    %286 = vector.load %arg8[%c0_86, %c0_87] : memref<8x128xf32, #tpu.memory_space<vmem>>, vector<8x128xf32>
    tpu.vector_store %arg8[%c0_86, %c0_87], %278 {strides = array<i32>} : memref<8x128xf32, #tpu.memory_space<vmem>>, vector<8x128xf32>,
    %c0_i32_88 = arith.constant 0 : i32
    %287 = arith.cmpi eq, %arg1, %c0_i32_88 : i32
    %288 = arith.extui %287 : i1 to i32
    %c0_i32_89 = arith.constant 0 : i32
    %289 = arith.cmpi ne, %288, %c0_i32_89 : i32
    scf.if %289 {
      %c0_90 = arith.constant 0 : index
      %c0_91 = arith.constant 0 : index
      %290 = vector.load %arg7[%c0_90, %c0_91] : memref<8x128xf32, #tpu.memory_space<vmem>>, vector<8x128xf32>
      %c0_92 = arith.constant 0 : index
      %c0_93 = arith.constant 0 : index
      %291 = vector.load %arg5[%c0_92, %c0_93] : memref<8x128xf32, #tpu.memory_space<vmem>>, vector<8x128xf32>
      tpu.vector_store %arg5[%c0_92, %c0_93], %290 {strides = array<i32>} : memref<8x128xf32, #tpu.memory_space<vmem>>, vector<8x128xf32>,
      %c0_94 = arith.constant 0 : index
      %c0_95 = arith.constant 0 : index
      %292 = vector.load %arg8[%c0_94, %c0_95] : memref<8x128xf32, #tpu.memory_space<vmem>>, vector<8x128xf32>
      %c0_96 = arith.constant 0 : index
      %c0_97 = arith.constant 0 : index
      %293 = vector.load %arg6[%c0_96, %c0_97] : memref<8x128xf32, #tpu.memory_space<vmem>>, vector<8x128xf32>
      tpu.vector_store %arg6[%c0_96, %c0_97], %292 {strides = array<i32>} : memref<8x128xf32, #tpu.memory_space<vmem>>, vector<8x128xf32>,
    } else {
    }
    return
  }
  func.func @transform_0(%arg0: i32, %arg1: i32) -> (i32, i32, i32) {
    %c0_i32 = arith.constant 0 : i32
    %c0_i32_0 = arith.constant 0 : i32
    return %arg1, %arg0, %c0_i32 : i32, i32, i32
  }
  func.func @transform_1(%arg0: i32, %arg1: i32) -> (i32, i32) {
    %c0_i32 = arith.constant 0 : i32
    %c0_i32_0 = arith.constant 0 : i32
    %c0_i32_1 = arith.constant 0 : i32
    return %c0_i32, %c0_i32_0 : i32, i32
  }
  func.func @transform_2(%arg0: i32, %arg1: i32) -> (i32, i32, i32) {
    %c0_i32 = arith.constant 0 : i32
    %c0_i32_0 = arith.constant 0 : i32
    return %arg1, %arg0, %c0_i32 : i32, i32, i32
  }
  func.func @transform_3(%arg0: i32, %arg1: i32) -> (i32, i32) {
    %c0_i32 = arith.constant 0 : i32
    %c0_i32_0 = arith.constant 0 : i32
    return %arg0, %c0_i32 : i32, i32
  }
  func.func @transform_4(%arg0: i32, %arg1: i32) -> (i32, i32) {
    %c0_i32 = arith.constant 0 : i32
    %c0_i32_0 = arith.constant 0 : i32
    return %arg0, %c0_i32 : i32, i32
  }
}

</mosaic_0001>

<llo_original>
// kernel: seq2seq_forward.2
$region0: #{seq2seq_forward.2}
  #allocation0 [shape = 'u32[]', space=smem, size = 0x4, offset = 0x4, fixed_abs, tag = 'smem constant byte address 0x4 - core index']
  #allocation1 [shape = 'u32[144,128]{1,0:T(1,128)}', space=vmem, size = 0x12000, scoped, tag = 'internal scratch']
  #allocation2 [shape = 'f32[8,128]{1,0:T(8,128)}', space=vmem, size = 0x1000, scoped, tag = 'scratch operand']
  #allocation3 [shape = 'f32[8,128]{1,0:T(8,128)}', space=vmem, size = 0x1000, scoped, tag = 'scratch operand']
  %s0 = inlined_call_operand.vmem [shape: f32[8,8,512], index: 0, kind: input, shape index: {}]
  %s1 = inlined_call_operand.vmem [shape: f32[128,512], index: 1, kind: input, shape index: {}]
  %s2 = inlined_call_operand.vmem [shape: f32[8,8,128], index: 2, kind: output, shape index: {0}]
  %s3 = inlined_call_operand.vmem [shape: f32[8,128], index: 3, kind: output, shape index: {1}]
  %s4 = inlined_call_operand.vmem [shape: f32[8,128], index: 4, kind: output, shape index: {2}]
  %5 = xla_tuple %s2, %s3, %s4
  %s6 = sld [smem:[#allocation0]]
  $region42: #{seq2seq_forward.2} parent=0
    _
  %s8 = ssub.s32 1, %s6
  %s9 = scalar_select 0, %s8, %s6
  // Predicated region
  $region2: #{seq2seq_forward.2} parent=0 // pred_check
    _
  $region3: #{seq2seq_forward.2} parent=0 // pred_check_branch
    %11 = sbr.rel (0) target = $region5
  $region4: #{seq2seq_forward.2} parent=0 // pred_region
    _
  $region5: #{seq2seq_forward.2} parent=0 // pred_fallthru
    _
  // Predicated region
  $region6: #{seq2seq_forward.2} parent=0 // pred_check
    _
  $region7: #{seq2seq_forward.2} parent=0 // pred_check_branch
    %13 = sbr.rel (0) target = $region9
  $region8: #{seq2seq_forward.2} parent=0 // pred_region
    _
  $region9: #{seq2seq_forward.2} parent=0 // pred_fallthru
    _
  %p14 = scmp.eq.s32.totalorder 0, 0
  // Predicated region
  $region10: #{seq2seq_forward.2} parent=0 // pred_check
    %p15 = pneg %p14
  $region11: #{seq2seq_forward.2} parent=0 // pred_check_branch
    %17 = sbr.rel (%p15) target = $region13
  $region12: #{seq2seq_forward.2} parent=0 // pred_region
    %18 = vst [vmem:[#allocation2] sm:$0xff] 0.0
    %19 = vst [vmem:[#allocation3] sm:$0xff] 0.0
  $region13: #{seq2seq_forward.2} parent=0 // pred_fallthru
    _
  %v20 = vld [vmem:[#allocation2] sm:$0xff]
  %v21 = vld [vmem:[#allocation3] sm:$0xff]
  %v22 = vld [vmem:[%s0] sm:$0xff]
  %v23 = vld [vmem:[%s0 + $0x8] sm:$0xff]
  %v24 = vld [vmem:[%s0 + $0x10] sm:$0xff]
  %v25 = vld [vmem:[%s0 + $0x18] sm:$0xff]
  %v26 = vld [vmem:[%s1] sm:$0xff]
  %v27 = vld [vmem:[%s1 + $0x8] sm:$0xff]
  %v28 = vld [vmem:[%s1 + $0x10] sm:$0xff]
  %v29 = vld [vmem:[%s1 + $0x18] sm:$0xff]
  %v30 = vld [vmem:[%s1 + $0x20] sm:$0xff]
  %v31 = vld [vmem:[%s1 + $0x28] sm:$0xff]
  %v32 = vld [vmem:[%s1 + $0x30] sm:$0xff]
  %v33 = vld [vmem:[%s1 + $0x38] sm:$0xff]
  %v34 = vld [vmem:[%s1 + $0x40] sm:$0xff]
  %v35 = vld [vmem:[%s1 + $0x48] sm:$0xff]
  %v36 = vld [vmem:[%s1 + $0x50] sm:$0xff]
  %v37 = vld [vmem:[%s1 + $0x58] sm:$0xff]
  %v38 = vld [vmem:[%s1 + $0x60] sm:$0xff]
  %v39 = vld [vmem:[%s1 + $0x68] sm:$0xff]
  %v40 = vld [vmem:[%s1 + $0x70] sm:$0xff]
  %v41 = vld [vmem:[%s1 + $0x78] sm:$0xff]
  %v42 = vld [vmem:[%s1 + $0x80] sm:$0xff]
  %v43 = vld [vmem:[%s1 + $0x88] sm:$0xff]
  %v44 = vld [vmem:[%s1 + $0x90] sm:$0xff]
  %v45 = vld [vmem:[%s1 + $0x98] sm:$0xff]
  %v46 = vld [vmem:[%s1 + $0xa0] sm:$0xff]
  %v47 = vld [vmem:[%s1 + $0xa8] sm:$0xff]
  %v48 = vld [vmem:[%s1 + $0xb0] sm:$0xff]
  %v49 = vld [vmem:[%s1 + $0xb8] sm:$0xff]
  %v50 = vld [vmem:[%s1 + $0xc0] sm:$0xff]
  %v51 = vld [vmem:[%s1 + $0xc8] sm:$0xff]
  %v52 = vld [vmem:[%s1 + $0xd0] sm:$0xff]
  %v53 = vld [vmem:[%s1 + $0xd8] sm:$0xff]
  %v54 = vld [vmem:[%s1 + $0xe0] sm:$0xff]
  %v55 = vld [vmem:[%s1 + $0xe8] sm:$0xff]
  %v56 = vld [vmem:[%s1 + $0xf0] sm:$0xff]
  %v57 = vld [vmem:[%s1 + $0xf8] sm:$0xff]
  %v58 = vld [vmem:[%s1 + $0x100] sm:$0xff]
  %v59 = vld [vmem:[%s1 + $0x108] sm:$0xff]
  %v60 = vld [vmem:[%s1 + $0x110] sm:$0xff]
  %v61 = vld [vmem:[%s1 + $0x118] sm:$0xff]
  %v62 = vld [vmem:[%s1 + $0x120] sm:$0xff]
  %v63 = vld [vmem:[%s1 + $0x128] sm:$0xff]
  %v64 = vld [vmem:[%s1 + $0x130] sm:$0xff]
  %v65 = vld [vmem:[%s1 + $0x138] sm:$0xff]
  %v66 = vld [vmem:[%s1 + $0x140] sm:$0xff]
  %v67 = vld [vmem:[%s1 + $0x148] sm:$0xff]
  %v68 = vld [vmem:[%s1 + $0x150] sm:$0xff]
  %v69 = vld [vmem:[%s1 + $0x158] sm:$0xff]
  %v70 = vld [vmem:[%s1 + $0x160] sm:$0xff]
  %v71 = vld [vmem:[%s1 + $0x168] sm:$0xff]
  %v72 = vld [vmem:[%s1 + $0x170] sm:$0xff]
  %v73 = vld [vmem:[%s1 + $0x178] sm:$0xff]
  %v74 = vld [vmem:[%s1 + $0x180] sm:$0xff]
  %v75 = vld [vmem:[%s1 + $0x188] sm:$0xff]
  %v76 = vld [vmem:[%s1 + $0x190] sm:$0xff]
  %v77 = vld [vmem:[%s1 + $0x198] sm:$0xff]
  %v78 = vld [vmem:[%s1 + $0x1a0] sm:$0xff]
  %v79 = vld [vmem:[%s1 + $0x1a8] sm:$0xff]
  %v80 = vld [vmem:[%s1 + $0x1b0] sm:$0xff]
  %v81 = vld [vmem:[%s1 + $0x1b8] sm:$0xff]
  %v82 = vld [vmem:[%s1 + $0x1c0] sm:$0xff]
  %v83 = vld [vmem:[%s1 + $0x1c8] sm:$0xff]
  %v84 = vld [vmem:[%s1 + $0x1d0] sm:$0xff]
  %v85 = vld [vmem:[%s1 + $0x1d8] sm:$0xff]
  %v86 = vld [vmem:[%s1 + $0x1e0] sm:$0xff]
  %v87 = vld [vmem:[%s1 + $0x1e8] sm:$0xff]
  %v88 = vld [vmem:[%s1 + $0x1f0] sm:$0xff]
  %v89 = vld [vmem:[%s1 + $0x1f8] sm:$0xff]
  %90 = vmatprep.subr.mxu0 %v27
  %91 = vmatpush1.msra.mxu0 %v26
  %92 = vmatprep.subr.mxu0 %v31
  %93 = vmatpush1.msra.mxu0 %v30
  %94 = vmatprep.subr.mxu0 %v35
  %95 = vmatpush1.msra.mxu0 %v34
  %96 = vmatprep.subr.mxu0 %v39
  %97 = vmatpush1.msra.mxu0 %v38
  %98 = vmatprep.subr.mxu0 %v43
  %99 = vmatpush1.msra.mxu0 %v42
  %100 = vmatprep.subr.mxu0 %v47
  %101 = vmatpush1.msra.mxu0 %v46
  %102 = vmatprep.subr.mxu0 %v51
  %103 = vmatpush1.msra.mxu0 %v50
  %104 = vmatprep.subr.mxu0 %v55
  %105 = vmatpush1.msra.mxu0 %v54
  %106 = vmatprep.subr.mxu0 %v59
  %107 = vmatpush1.msra.mxu0 %v58
  %108 = vmatprep.subr.mxu0 %v63
  %109 = vmatpush1.msra.mxu0 %v62
  %110 = vmatprep.subr.mxu0 %v67
  %111 = vmatpush1.msra.mxu0 %v66
  %112 = vmatprep.subr.mxu0 %v71
  %113 = vmatpush1.msra.mxu0 %v70
  %114 = vmatprep.subr.mxu0 %v75
  %115 = vmatpush1.msra.mxu0 %v74
  %116 = vmatprep.subr.mxu0 %v79
  %117 = vmatpush1.msra.mxu0 %v78
  %118 = vmatprep.subr.mxu0 %v83
  %119 = vmatpush1.msra.mxu0 %v82
  %120 = vmatprep.subr.mxu0 %v87
  %121 = vmatpush1.msra.mxu0 %v86
  %122 = vmatprep.subr.mxu0 0.0
  %123 = vmatpush1.msra.mxu0 0.0
  %124 = vmatprep.subr.mxu0 0.0
  %125 = vmatpush1.msra.mxu0 0.0
  %126 = vmatprep.subr.mxu0 0.0
  %127 = vmatpush1.msra.mxu0 0.0
  %128 = vmatprep.subr.mxu0 0.0
  %129 = vmatpush1.msra.mxu0 0.0
  %130 = vmatprep.subr.mxu0 0.0
  %131 = vmatpush1.msra.mxu0 0.0
  %132 = vmatprep.subr.mxu0 0.0
  %133 = vmatpush1.msra.mxu0 0.0
  %134 = vmatprep.subr.mxu0 0.0
  %135 = vmatpush1.msra.mxu0 0.0
  %136 = vmatprep.subr.mxu0 0.0
  %137 = vmatpush1.msra.mxu0 0.0
  %138 = vmatprep.subr.mxu0 0.0
  %139 = vmatpush1.msra.mxu0 0.0
  %140 = vmatprep.subr.mxu0 0.0
  %141 = vmatpush1.msra.mxu0 0.0
  %142 = vmatprep.subr.mxu0 0.0
  %143 = vmatpush1.msra.mxu0 0.0
  %144 = vmatprep.subr.mxu0 0.0
  %145 = vmatpush1.msra.mxu0 0.0
  %146 = vmatprep.subr.mxu0 0.0
  %147 = vmatpush1.msra.mxu0 0.0
  %148 = vmatprep.subr.mxu0 0.0
  %149 = vmatpush1.msra.mxu0 0.0
  %150 = vmatprep.subr.mxu0 0.0
  %151 = vmatpush1.msra.mxu0 0.0
  %152 = vmatprep.subr.mxu0 0.0
  %153 = vmatpush1.msra.mxu0 0.0
  %154 = vmatprep.mubr.f32.mxu0 0.0
  %155 = vmatmul.mubr.f32.gmra.mrb[0].mxu0 %v20
  %v156 = vpop.f32.mrb[0].mxu0
  %v157 = vadd.f32 0.0, %v156
  %v158 = vpop.f32.mrb[0].mxu0
  %v159 = vadd.f32 0.0, %v158
  %160 = vdwg.mxu0
  %161 = vmatprep.subr.mxu0 %v29
  %162 = vmatpush1.msra.mxu0 %v28
  %163 = vmatprep.subr.mxu0 %v33
  %164 = vmatpush1.msra.mxu0 %v32
  %165 = vmatprep.subr.mxu0 %v37
  %166 = vmatpush1.msra.mxu0 %v36
  %167 = vmatprep.subr.mxu0 %v41
  %168 = vmatpush1.msra.mxu0 %v40
  %169 = vmatprep.subr.mxu0 %v45
  %170 = vmatpush1.msra.mxu0 %v44
  %171 = vmatprep.subr.mxu0 %v49
  %172 = vmatpush1.msra.mxu0 %v48
  %173 = vmatprep.subr.mxu0 %v53
  %174 = vmatpush1.msra.mxu0 %v52
  %175 = vmatprep.subr.mxu0 %v57
  %176 = vmatpush1.msra.mxu0 %v56
  %177 = vmatprep.subr.mxu0 %v61
  %178 = vmatpush1.msra.mxu0 %v60
  %179 = vmatprep.subr.mxu0 %v65
  %180 = vmatpush1.msra.mxu0 %v64
  %181 = vmatprep.subr.mxu0 %v69
  %182 = vmatpush1.msra.mxu0 %v68
  %183 = vmatprep.subr.mxu0 %v73
  %184 = vmatpush1.msra.mxu0 %v72
  %185 = vmatprep.subr.mxu0 %v77
  %186 = vmatpush1.msra.mxu0 %v76
  %187 = vmatprep.subr.mxu0 %v81
  %188 = vmatpush1.msra.mxu0 %v80
  %189 = vmatprep.subr.mxu0 %v85
  %190 = vmatpush1.msra.mxu0 %v84
  %191 = vmatprep.subr.mxu0 %v89
  %192 = vmatpush1.msra.mxu0 %v88
  %193 = vmatprep.subr.mxu0 0.0
  %194 = vmatpush1.msra.mxu0 0.0
  %195 = vmatprep.subr.mxu0 0.0
  %196 = vmatpush1.msra.mxu0 0.0
  %197 = vmatprep.subr.mxu0 0.0
  %198 = vmatpush1.msra.mxu0 0.0
  %199 = vmatprep.subr.mxu0 0.0
  %200 = vmatpush1.msra.mxu0 0.0
  %201 = vmatprep.subr.mxu0 0.0
  %202 = vmatpush1.msra.mxu0 0.0
  %203 = vmatprep.subr.mxu0 0.0
  %204 = vmatpush1.msra.mxu0 0.0
  %205 = vmatprep.subr.mxu0 0.0
  %206 = vmatpush1.msra.mxu0 0.0
  %207 = vmatprep.subr.mxu0 0.0
  %208 = vmatpush1.msra.mxu0 0.0
  %209 = vmatprep.subr.mxu0 0.0
  %210 = vmatpush1.msra.mxu0 0.0
  %211 = vmatprep.subr.mxu0 0.0
  %212 = vmatpush1.msra.mxu0 0.0
  %213 = vmatprep.subr.mxu0 0.0
  %214 = vmatpush1.msra.mxu0 0.0
  %215 = vmatprep.subr.mxu0 0.0
  %216 = vmatpush1.msra.mxu0 0.0
  %217 = vmatprep.subr.mxu0 0.0
  %218 = vmatpush1.msra.mxu0 0.0
  %219 = vmatprep.subr.mxu0 0.0
  %220 = vmatpush1.msra.mxu0 0.0
  %221 = vmatprep.subr.mxu0 0.0
  %222 = vmatpush1.msra.mxu0 0.0
  %223 = vmatprep.subr.mxu0 0.0
  %224 = vmatpush1.msra.mxu0 0.0
  %225 = vmatprep.mubr.f32.mxu0 0.0
  %226 = vmatmul.mubr.f32.gmra.mrb[0].mxu0 %v20
  %v227 = vpop.f32.mrb[0].mxu0
  %v228 = vadd.f32 0.0, %v227
  %v229 = vpop.f32.mrb[0].mxu0
  %v230 = vadd.f32 0.0, %v229
  %231 = vdwg.mxu0
  %v232 = vadd.f32 %v22, %v157
  %v233 = vadd.f32 %v23, %v159
  %v234 = vadd.f32 %v24, %v228
  %v235 = vadd.f32 %v25, %v230
  %v236 = vxor.u32 %v232, 2147483648
  %v237 = vmul.f32 %v236, 1.442695
  %v238 = vpow.pop %v237
  %v239 = vadd.f32 %v238, 1.0
  %v240 = vrcp.pop %v239
  %v241 = vmul.f32 1.0, %v240
  %v242 = vxor.u32 %v233, 2147483648
  %v243 = vmul.f32 %v242, 1.442695
  %v244 = vpow.pop %v243
  %v245 = vadd.f32 %v244, 1.0
  %v246 = vrcp.pop %v245
  %v247 = vmul.f32 1.0, %v246
  %v248 = vtanh.pop %v234
  %v249 = vxor.u32 %v235, 2147483648
  %v250 = vmul.f32 %v249, 1.442695
  %v251 = vpow.pop %v250
  %v252 = vadd.f32 %v251, 1.0
  %v253 = vrcp.pop %v252
  %v254 = vmul.f32 1.0, %v253
  %v255 = vmul.f32 %v247, %v21
  %v256 = vmul.f32 %v241, %v248
  %v257 = vadd.f32 %v255, %v256
  %v258 = vtanh.pop %v257
  %v259 = vmul.f32 %v254, %v258
  %260 = vst [vmem:[%s2] sm:$0xff] %v259
  %s261 = scalar_lea.vmem %s0, 32
  %v262 = vld [vmem:[%s261] sm:$0xff]
  %v263 = vld [vmem:[%s261 + $0x8] sm:$0xff]
  %v264 = vld [vmem:[%s261 + $0x10] sm:$0xff]
  %v265 = vld [vmem:[%s261 + $0x18] sm:$0xff]
  %v266 = vld [vmem:[%s1] sm:$0xff]
  %v267 = vld [vmem:[%s1 + $0x8] sm:$0xff]
  %v268 = vld [vmem:[%s1 + $0x10] sm:$0xff]
  %v269 = vld [vmem:[%s1 + $0x18] sm:$0xff]
  %v270 = vld [vmem:[%s1 + $0x20] sm:$0xff]
  %v271 = vld [vmem:[%s1 + $0x28] sm:$0xff]
  %v272 = vld [vmem:[%s1 + $0x30] sm:$0xff]
  %v273 = vld [vmem:[%s1 + $0x38] sm:$0xff]
  %v274 = vld [vmem:[%s1 + $0x40] sm:$0xff]
  %v275 = vld [vmem:[%s1 + $0x48] sm:$0xff]
  %v276 = vld [vmem:[%s1 + $0x50] sm:$0xff]
  %v277 = vld [vmem:[%s1 + $0x58] sm:$0xff]
  %v278 = vld [vmem:[%s1 + $0x60] sm:$0xff]
  %v279 = vld [vmem:[%s1 + $0x68] sm:$0xff]
  %v280 = vld [vmem:[%s1 + $0x70] sm:$0xff]
  %v281 = vld [vmem:[%s1 + $0x78] sm:$0xff]
  %v282 = vld [vmem:[%s1 + $0x80] sm:$0xff]
  %v283 = vld [vmem:[%s1 + $0x88] sm:$0xff]
  %v284 = vld [vmem:[%s1 + $0x90] sm:$0xff]
  %v285 = vld [vmem:[%s1 + $0x98] sm:$0xff]
  %v286 = vld [vmem:[%s1 + $0xa0] sm:$0xff]
  %v287 = vld [vmem:[%s1 + $0xa8] sm:$0xff]
  %v288 = vld [vmem:[%s1 + $0xb0] sm:$0xff]
  %v289 = vld [vmem:[%s1 + $0xb8] sm:$0xff]
  %v290 = vld [vmem:[%s1 + $0xc0] sm:$0xff]
  %v291 = vld [vmem:[%s1 + $0xc8] sm:$0xff]
  %v292 = vld [vmem:[%s1 + $0xd0] sm:$0xff]
  %v293 = vld [vmem:[%s1 + $0xd8] sm:$0xff]
  %v294 = vld [vmem:[%s1 + $0xe0] sm:$0xff]
  %v295 = vld [vmem:[%s1 + $0xe8] sm:$0xff]
  %v296 = vld [vmem:[%s1 + $0xf0] sm:$0xff]
  %v297 = vld [vmem:[%s1 + $0xf8] sm:$0xff]
  %v298 = vld [vmem:[%s1 + $0x100] sm:$0xff]
  %v299 = vld [vmem:[%s1 + $0x108] sm:$0xff]
  %v300 = vld [vmem:[%s1 + $0x110] sm:$0xff]
  %v301 = vld [vmem:[%s1 + $0x118] sm:$0xff]
  %v302 = vld [vmem:[%s1 + $0x120] sm:$0xff]
  %v303 = vld [vmem:[%s1 + $0x128] sm:$0xff]
  %v304 = vld [vmem:[%s1 + $0x130] sm:$0xff]
  %v305 = vld [vmem:[%s1 + $0x138] sm:$0xff]
  %v306 = vld [vmem:[%s1 + $0x140] sm:$0xff]
  %v307 = vld [vmem:[%s1 + $0x148] sm:$0xff]
  %v308 = vld [vmem:[%s1 + $0x150] sm:$0xff]
  %v309 = vld [vmem:[%s1 + $0x158] sm:$0xff]
  %v310 = vld [vmem:[%s1 + $0x160] sm:$0xff]
  %v311 = vld [vmem:[%s1 + $0x168] sm:$0xff]
  %v312 = vld [vmem:[%s1 + $0x170] sm:$0xff]
  %v313 = vld [vmem:[%s1 + $0x178] sm:$0xff]
  %v314 = vld [vmem:[%s1 + $0x180] sm:$0xff]
  %v315 = vld [vmem:[%s1 + $0x188] sm:$0xff]
  %v316 = vld [vmem:[%s1 + $0x190] sm:$0xff]
  %v317 = vld [vmem:[%s1 + $0x198] sm:$0xff]
  %v318 = vld [vmem:[%s1 + $0x1a0] sm:$0xff]
  %v319 = vld [vmem:[%s1 + $0x1a8] sm:$0xff]
  %v320 = vld [vmem:[%s1 + $0x1b0] sm:$0xff]
  %v321 = vld [vmem:[%s1 + $0x1b8] sm:$0xff]
  %v322 = vld [vmem:[%s1 + $0x1c0] sm:$0xff]
  %v323 = vld [vmem:[%s1 + $0x1c8] sm:$0xff]
  %v324 = vld [vmem:[%s1 + $0x1d0] sm:$0xff]
  %v325 = vld [vmem:[%s1 + $0x1d8] sm:$0xff]
  %v326 = vld [vmem:[%s1 + $0x1e0] sm:$0xff]
  %v327 = vld [vmem:[%s1 + $0x1e8] sm:$0xff]
  %v328 = vld [vmem:[%s1 + $0x1f0] sm:$0xff]
  %v329 = vld [vmem:[%s1 + $0x1f8] sm:$0xff]
  %330 = vmatprep.subr.mxu0 %v267
  %331 = vmatpush1.msra.mxu0 %v266
  %332 = vmatprep.subr.mxu0 %v271
  %333 = vmatpush1.msra.mxu0 %v270
  %334 = vmatprep.subr.mxu0 %v275
  %335 = vmatpush1.msra.mxu0 %v274
  %336 = vmatprep.subr.mxu0 %v279
  %337 = vmatpush1.msra.mxu0 %v278
  %338 = vmatprep.subr.mxu0 %v283
  %339 = vmatpush1.msra.mxu0 %v282
  %340 = vmatprep.subr.mxu0 %v287
  %341 = vmatpush1.msra.mxu0 %v286
  %342 = vmatprep.subr.mxu0 %v291
  %343 = vmatpush1.msra.mxu0 %v290
  %344 = vmatprep.subr.mxu0 %v295
  %345 = vmatpush1.msra.mxu0 %v294
  %346 = vmatprep.subr.mxu0 %v299
  %347 = vmatpush1.msra.mxu0 %v298
  %348 = vmatprep.subr.mxu0 %v303
  %349 = vmatpush1.msra.mxu0 %v302
  %350 = vmatprep.subr.mxu0 %v307
  %351 = vmatpush1.msra.mxu0 %v306
  %352 = vmatprep.subr.mxu0 %v311
  %353 = vmatpush1.msra.mxu0 %v310
  %354 = vmatprep.subr.mxu0 %v315
  %355 = vmatpush1.msra.mxu0 %v314
  %356 = vmatprep.subr.mxu0 %v319
  %357 = vmatpush1.msra.mxu0 %v318
  %358 = vmatprep.subr.mxu0 %v323
  %359 = vmatpush1.msra.mxu0 %v322
  %360 = vmatprep.subr.mxu0 %v327
  %361 = vmatpush1.msra.mxu0 %v326
  %362 = vmatprep.subr.mxu0 0.0
  %363 = vmatpush1.msra.mxu0 0.0
  %364 = vmatprep.subr.mxu0 0.0
  %365 = vmatpush1.msra.mxu0 0.0
  %366 = vmatprep.subr.mxu0 0.0
  %367 = vmatpush1.msra.mxu0 0.0
  %368 = vmatprep.subr.mxu0 0.0
  %369 = vmatpush1.msra.mxu0 0.0
  %370 = vmatprep.subr.mxu0 0.0
  %371 = vmatpush1.msra.mxu0 0.0
  %372 = vmatprep.subr.mxu0 0.0
  %373 = vmatpush1.msra.mxu0 0.0
  %374 = vmatprep.subr.mxu0 0.0
  %375 = vmatpush1.msra.mxu0 0.0
  %376 = vmatprep.subr.mxu0 0.0
  %377 = vmatpush1.msra.mxu0 0.0
  %378 = vmatprep.subr.mxu0 0.0
  %379 = vmatpush1.msra.mxu0 0.0
  %380 = vmatprep.subr.mxu0 0.0
  %381 = vmatpush1.msra.mxu0 0.0
  %382 = vmatprep.subr.mxu0 0.0
  %383 = vmatpush1.msra.mxu0 0.0
  %384 = vmatprep.subr.mxu0 0.0
  %385 = vmatpush1.msra.mxu0 0.0
  %386 = vmatprep.subr.mxu0 0.0
  %387 = vmatpush1.msra.mxu0 0.0
  %388 = vmatprep.subr.mxu0 0.0
  %389 = vmatpush1.msra.mxu0 0.0
  %390 = vmatprep.subr.mxu0 0.0
  %391 = vmatpush1.msra.mxu0 0.0
  %392 = vmatprep.subr.mxu0 0.0
  %393 = vmatpush1.msra.mxu0 0.0
  %394 = vmatprep.mubr.f32.mxu0 0.0
  %395 = vmatmul.mubr.f32.gmra.mrb[0].mxu0 %v259
  %v396 = vpop.f32.mrb[0].mxu0
  %v397 = vadd.f32 0.0, %v396
  %v398 = vpop.f32.mrb[0].mxu0
  %v399 = vadd.f32 0.0, %v398
  %400 = vdwg.mxu0
  %401 = vmatprep.subr.mxu0 %v269
  %402 = vmatpush1.msra.mxu0 %v268
  %403 = vmatprep.subr.mxu0 %v273
  %404 = vmatpush1.msra.mxu0 %v272
  %405 = vmatprep.subr.mxu0 %v277
  %406 = vmatpush1.msra.mxu0 %v276
  %407 = vmatprep.subr.mxu0 %v281
  %408 = vmatpush1.msra.mxu0 %v280
  %409 = vmatprep.subr.mxu0 %v285
  %410 = vmatpush1.msra.mxu0 %v284
  %411 = vmatprep.subr.mxu0 %v289
  %412 = vmatpush1.msra.mxu0 %v288
  %413 = vmatprep.subr.mxu0 %v293
  %414 = vmatpush1.msra.mxu0 %v292
  %415 = vmatprep.subr.mxu0 %v297
  %416 = vmatpush1.msra.mxu0 %v296
  %417 = vmatprep.subr.mxu0 %v301
  %418 = vmatpush1.msra.mxu0 %v300
  %419 = vmatprep.subr.mxu0 %v305
  %420 = vmatpush1.msra.mxu0 %v304
  %421 = vmatprep.subr.mxu0 %v309
  %422 = vmatpush1.msra.mxu0 %v308
  %423 = vmatprep.subr.mxu0 %v313
  %424 = vmatpush1.msra.mxu0 %v312
  %425 = vmatprep.subr.mxu0 %v317
  %426 = vmatpush1.msra.mxu0 %v316
  %427 = vmatprep.subr.mxu0 %v321
  %428 = vmatpush1.msra.mxu0 %v320
  %429 = vmatprep.subr.mxu0 %v325
  %430 = vmatpush1.msra.mxu0 %v324
  %431 = vmatprep.subr.mxu0 %v329
  %432 = vmatpush1.msra.mxu0 %v328
  %433 = vmatprep.subr.mxu0 0.0
  %434 = vmatpush1.msra.mxu0 0.0
  %435 = vmatprep.subr.mxu0 0.0
  %436 = vmatpush1.msra.mxu0 0.0
  %437 = vmatprep.subr.mxu0 0.0
  %438 = vmatpush1.msra.mxu0 0.0
  %439 = vmatprep.subr.mxu0 0.0
  %440 = vmatpush1.msra.mxu0 0.0
  %441 = vmatprep.subr.mxu0 0.0
  %442 = vmatpush1.msra.mxu0 0.0
  %443 = vmatprep.subr.mxu0 0.0
  %444 = vmatpush1.msra.mxu0 0.0
  %445 = vmatprep.subr.mxu0 0.0
  %446 = vmatpush1.msra.mxu0 0.0
  %447 = vmatprep.subr.mxu0 0.0
  %448 = vmatpush1.msra.mxu0 0.0
  %449 = vmatprep.subr.mxu0 0.0
  %450 = vmatpush1.msra.mxu0 0.0
  %451 = vmatprep.subr.mxu0 0.0
  %452 = vmatpush1.msra.mxu0 0.0
  %453 = vmatprep.subr.mxu0 0.0
  %454 = vmatpush1.msra.mxu0 0.0
  %455 = vmatprep.subr.mxu0 0.0
  %456 = vmatpush1.msra.mxu0 0.0
  %457 = vmatprep.subr.mxu0 0.0
  %458 = vmatpush1.msra.mxu0 0.0
  %459 = vmatprep.subr.mxu0 0.0
  %460 = vmatpush1.msra.mxu0 0.0
  %461 = vmatprep.subr.mxu0 0.0
  %462 = vmatpush1.msra.mxu0 0.0
  %463 = vmatprep.subr.mxu0 0.0
  %464 = vmatpush1.msra.mxu0 0.0
  %465 = vmatprep.mubr.f32.mxu0 0.0
  %466 = vmatmul.mubr.f32.gmra.mrb[0].mxu0 %v259
  %v467 = vpop.f32.mrb[0].mxu0
  %v468 = vadd.f32 0.0, %v467
  %v469 = vpop.f32.mrb[0].mxu0
  %v470 = vadd.f32 0.0, %v469
  %471 = vdwg.mxu0
  %v472 = vadd.f32 %v262, %v397
  %v473 = vadd.f32 %v263, %v399
  %v474 = vadd.f32 %v264, %v468
  %v475 = vadd.f32 %v265, %v470
  %v476 = vxor.u32 %v472, 2147483648
  %v477 = vmul.f32 %v476, 1.442695
  %v478 = vpow.pop %v477
  %v479 = vadd.f32 %v478, 1.0
  %v480 = vrcp.pop %v479
  %v481 = vmul.f32 1.0, %v480
  %v482 = vxor.u32 %v473, 2147483648
  %v483 = vmul.f32 %v482, 1.442695
  %v484 = vpow.pop %v483
  %v485 = vadd.f32 %v484, 1.0
  %v486 = vrcp.pop %v485
  %v487 = vmul.f32 1.0, %v486
  %v488 = vtanh.pop %v474
  %v489 = vxor.u32 %v475, 2147483648
  %v490 = vmul.f32 %v489, 1.442695
  %v491 = vpow.pop %v490
  %v492 = vadd.f32 %v491, 1.0
  %v493 = vrcp.pop %v492
  %v494 = vmul.f32 1.0, %v493
  %v495 = vmul.f32 %v487, %v257
  %v496 = vmul.f32 %v481, %v488
  %v497 = vadd.f32 %v495, %v496
  %v498 = vtanh.pop %v497
  %v499 = vmul.f32 %v494, %v498
  %s500 = scalar_lea.vmem %s2, 8
  %501 = vst [vmem:[%s500] sm:$0xff] %v499
  %s502 = scalar_lea.vmem %s0, 64
  %v503 = vld [vmem:[%s502] sm:$0xff]
  %v504 = vld [vmem:[%s502 + $0x8] sm:$0xff]
  %v505 = vld [vmem:[%s502 + $0x10] sm:$0xff]
  %v506 = vld [vmem:[%s502 + $0x18] sm:$0xff]
  %v507 = vld [vmem:[%s1] sm:$0xff]
  %v508 = vld [vmem:[%s1 + $0x8] sm:$0xff]
  %v509 = vld [vmem:[%s1 + $0x10] sm:$0xff]
  %v510 = vld [vmem:[%s1 + $0x18] sm:$0xff]
  %v511 = vld [vmem:[%s1 + $0x20] sm:$0xff]
  %v512 = vld [vmem:[%s1 + $0x28] sm:$0xff]
  %v513 = vld [vmem:[%s1 + $0x30] sm:$0xff]
  %v514 = vld [vmem:[%s1 + $0x38] sm:$0xff]
  %v515 = vld [vmem:[%s1 + $0x40] sm:$0xff]
  %v516 = vld [vmem:[%s1 + $0x48] sm:$0xff]
  %v517 = vld [vmem:[%s1 + $0x50] sm:$0xff]
  %v518 = vld [vmem:[%s1 + $0x58] sm:$0xff]
  %v519 = vld [vmem:[%s1 + $0x60] sm:$0xff]
  %v520 = vld [vmem:[%s1 + $0x68] sm:$0xff]
  %v521 = vld [vmem:[%s1 + $0x70] sm:$0xff]
  %v522 = vld [vmem:[%s1 + $0x78] sm:$0xff]
  %v523 = vld [vmem:[%s1 + $0x80] sm:$0xff]
  %v524 = vld [vmem:[%s1 + $0x88] sm:$0xff]
  %v525 = vld [vmem:[%s1 + $0x90] sm:$0xff]
  %v526 = vld [vmem:[%s1 + $0x98] sm:$0xff]
  %v527 = vld [vmem:[%s1 + $0xa0] sm:$0xff]
  %v528 = vld [vmem:[%s1 + $0xa8] sm:$0xff]
  %v529 = vld [vmem:[%s1 + $0xb0] sm:$0xff]
  %v530 = vld [vmem:[%s1 + $0xb8] sm:$0xff]
  %v531 = vld [vmem:[%s1 + $0xc0] sm:$0xff]
  %v532 = vld [vmem:[%s1 + $0xc8] sm:$0xff]
  %v533 = vld [vmem:[%s1 + $0xd0] sm:$0xff]
  %v534 = vld [vmem:[%s1 + $0xd8] sm:$0xff]
  %v535 = vld [vmem:[%s1 + $0xe0] sm:$0xff]
  %v536 = vld [vmem:[%s1 + $0xe8] sm:$0xff]
  %v537 = vld [vmem:[%s1 + $0xf0] sm:$0xff]
  %v538 = vld [vmem:[%s1 + $0xf8] sm:$0xff]
  %v539 = vld [vmem:[%s1 + $0x100] sm:$0xff]
  %v540 = vld [vmem:[%s1 + $0x108] sm:$0xff]
  %v541 = vld [vmem:[%s1 + $0x110] sm:$0xff]
  %v542 = vld [vmem:[%s1 + $0x118] sm:$0xff]
  %v543 = vld [vmem:[%s1 + $0x120] sm:$0xff]
  %v544 = vld [vmem:[%s1 + $0x128] sm:$0xff]
  %v545 = vld [vmem:[%s1 + $0x130] sm:$0xff]
  %v546 = vld [vmem:[%s1 + $0x138] sm:$0xff]
  %v547 = vld [vmem:[%s1 + $0x140] sm:$0xff]
  %v548 = vld [vmem:[%s1 + $0x148] sm:$0xff]
  %v549 = vld [vmem:[%s1 + $0x150] sm:$0xff]
  %v550 = vld [vmem:[%s1 + $0x158] sm:$0xff]
  %v551 = vld [vmem:[%s1 + $0x160] sm:$0xff]
  %v552 = vld [vmem:[%s1 + $0x168] sm:$0xff]
  %v553 = vld [vmem:[%s1 + $0x170] sm:$0xff]
  %v554 = vld [vmem:[%s1 + $0x178] sm:$0xff]
  %v555 = vld [vmem:[%s1 + $0x180] sm:$0xff]
  %v556 = vld [vmem:[%s1 + $0x188] sm:$0xff]
  %v557 = vld [vmem:[%s1 + $0x190] sm:$0xff]
  %v558 = vld [vmem:[%s1 + $0x198] sm:$0xff]
  %v559 = vld [vmem:[%s1 + $0x1a0] sm:$0xff]
  %v560 = vld [vmem:[%s1 + $0x1a8] sm:$0xff]
  %v561 = vld [vmem:[%s1 + $0x1b0] sm:$0xff]
  %v562 = vld [vmem:[%s1 + $0x1b8] sm:$0xff]
  %v563 = vld [vmem:[%s1 + $0x1c0] sm:$0xff]
  %v564 = vld [vmem:[%s1 + $0x1c8] sm:$0xff]
  %v565 = vld [vmem:[%s1 + $0x1d0] sm:$0xff]
  %v566 = vld [vmem:[%s1 + $0x1d8] sm:$0xff]
  %v567 = vld [vmem:[%s1 + $0x1e0] sm:$0xff]
  %v568 = vld [vmem:[%s1 + $0x1e8] sm:$0xff]
  %v569 = vld [vmem:[%s1 + $0x1f0] sm:$0xff]
  %v570 = vld [vmem:[%s1 + $0x1f8] sm:$0xff]
  %571 = vmatprep.subr.mxu0 %v508
  %572 = vmatpush1.msra.mxu0 %v507
  %573 = vmatprep.subr.mxu0 %v512
  %574 = vmatpush1.msra.mxu0 %v511
  %575 = vmatprep.subr.mxu0 %v516
  %576 = vmatpush1.msra.mxu0 %v515
  %577 = vmatprep.subr.mxu0 %v520
  %578 = vmatpush1.msra.mxu0 %v519
  %579 = vmatprep.subr.mxu0 %v524
  %580 = vmatpush1.msra.mxu0 %v523
  %581 = vmatprep.subr.mxu0 %v528
  %582 = vmatpush1.msra.mxu0 %v527
  %583 = vmatprep.subr.mxu0 %v532
  %584 = vmatpush1.msra.mxu0 %v531
  %585 = vmatprep.subr.mxu0 %v536
  %586 = vmatpush1.msra.mxu0 %v535
  %587 = vmatprep.subr.mxu0 %v540
  %588 = vmatpush1.msra.mxu0 %v539
  %589 = vmatprep.subr.mxu0 %v544
  %590 = vmatpush1.msra.mxu0 %v543
  %591 = vmatprep.subr.mxu0 %v548
  %592 = vmatpush1.msra.mxu0 %v547
  %593 = vmatprep.subr.mxu0 %v552
  %594 = vmatpush1.msra.mxu0 %v551
  %595 = vmatprep.subr.mxu0 %v556
  %596 = vmatpush1.msra.mxu0 %v555
  %597 = vmatprep.subr.mxu0 %v560
  %598 = vmatpush1.msra.mxu0 %v559
  %599 = vmatprep.subr.mxu0 %v564
  %600 = vmatpush1.msra.mxu0 %v563
  %601 = vmatprep.subr.mxu0 %v568
  %602 = vmatpush1.msra.mxu0 %v567
  %603 = vmatprep.subr.mxu0 0.0
  %604 = vmatpush1.msra.mxu0 0.0
  %605 = vmatprep.subr.mxu0 0.0
  %606 = vmatpush1.msra.mxu0 0.0
  %607 = vmatprep.subr.mxu0 0.0
  %608 = vmatpush1.msra.mxu0 0.0
  %609 = vmatprep.subr.mxu0 0.0
  %610 = vmatpush1.msra.mxu0 0.0
  %611 = vmatprep.subr.mxu0 0.0
  %612 = vmatpush1.msra.mxu0 0.0
  %613 = vmatprep.subr.mxu0 0.0
  %614 = vmatpush1.msra.mxu0 0.0
  %615 = vmatprep.subr.mxu0 0.0
  %616 = vmatpush1.msra.mxu0 0.0
  %617 = vmatprep.subr.mxu0 0.0
  %618 = vmatpush1.msra.mxu0 0.0
  %619 = vmatprep.subr.mxu0 0.0
  %620 = vmatpush1.msra.mxu0 0.0
  %621 = vmatprep.subr.mxu0 0.0
  %622 = vmatpush1.msra.mxu0 0.0
  %623 = vmatprep.subr.mxu0 0.0
  %624 = vmatpush1.msra.mxu0 0.0
  %625 = vmatprep.subr.mxu0 0.0
  %626 = vmatpush1.msra.mxu0 0.0
  %627 = vmatprep.subr.mxu0 0.0
  %628 = vmatpush1.msra.mxu0 0.0
  %629 = vmatprep.subr.mxu0 0.0
  %630 = vmatpush1.msra.mxu0 0.0
  %631 = vmatprep.subr.mxu0 0.0
  %632 = vmatpush1.msra.mxu0 0.0
  %633 = vmatprep.subr.mxu0 0.0
  %634 = vmatpush1.msra.mxu0 0.0
  %635 = vmatprep.mubr.f32.mxu0 0.0
  %636 = vmatmul.mubr.f32.gmra.mrb[0].mxu0 %v499
  %v637 = vpop.f32.mrb[0].mxu0
  %v638 = vadd.f32 0.0, %v637
  %v639 = vpop.f32.mrb[0].mxu0
  %v640 = vadd.f32 0.0, %v639
  %641 = vdwg.mxu0
  %642 = vmatprep.subr.mxu0 %v510
  %643 = vmatpush1.msra.mxu0 %v509
  %644 = vmatprep.subr.mxu0 %v514
  %645 = vmatpush1.msra.mxu0 %v513
  %646 = vmatprep.subr.mxu0 %v518
  %647 = vmatpush1.msra.mxu0 %v517
  %648 = vmatprep.subr.mxu0 %v522
  %649 = vmatpush1.msra.mxu0 %v521
  %650 = vmatprep.subr.mxu0 %v526
  %651 = vmatpush1.msra.mxu0 %v525
  %652 = vmatprep.subr.mxu0 %v530
  %653 = vmatpush1.msra.mxu0 %v529
  %654 = vmatprep.subr.mxu0 %v534
  %655 = vmatpush1.msra.mxu0 %v533
  %656 = vmatprep.subr.mxu0 %v538
  %657 = vmatpush1.msra.mxu0 %v537
  %658 = vmatprep.subr.mxu0 %v542
  %659 = vmatpush1.msra.mxu0 %v541
  %660 = vmatprep.subr.mxu0 %v546
  %661 = vmatpush1.msra.mxu0 %v545
  %662 = vmatprep.subr.mxu0 %v550
  %663 = vmatpush1.msra.mxu0 %v549
  %664 = vmatprep.subr.mxu0 %v554
  %665 = vmatpush1.msra.mxu0 %v553
  %666 = vmatprep.subr.mxu0 %v558
  %667 = vmatpush1.msra.mxu0 %v557
  %668 = vmatprep.subr.mxu0 %v562
  %669 = vmatpush1.msra.mxu0 %v561
  %670 = vmatprep.subr.mxu0 %v566
  %671 = vmatpush1.msra.mxu0 %v565
  %672 = vmatprep.subr.mxu0 %v570
  %673 = vmatpush1.msra.mxu0 %v569
  %674 = vmatprep.subr.mxu0 0.0
  %675 = vmatpush1.msra.mxu0 0.0
  %676 = vmatprep.subr.mxu0 0.0
  %677 = vmatpush1.msra.mxu0 0.0
  %678 = vmatprep.subr.mxu0 0.0
  %679 = vmatpush1.msra.mxu0 0.0
  %680 = vmatprep.subr.mxu0 0.0
  %681 = vmatpush1.msra.mxu0 0.0
  %682 = vmatprep.subr.mxu0 0.0
  %683 = vmatpush1.msra.mxu0 0.0
  %684 = vmatprep.subr.mxu0 0.0
  %685 = vmatpush1.msra.mxu0 0.0
  %686 = vmatprep.subr.mxu0 0.0
  %687 = vmatpush1.msra.mxu0 0.0
  %688 = vmatprep.subr.mxu0 0.0
  %689 = vmatpush1.msra.mxu0 0.0
  %690 = vmatprep.subr.mxu0 0.0
  %691 = vmatpush1.msra.mxu0 0.0
  %692 = vmatprep.subr.mxu0 0.0
  %693 = vmatpush1.msra.mxu0 0.0
  %694 = vmatprep.subr.mxu0 0.0
  %695 = vmatpush1.msra.mxu0 0.0
  %696 = vmatprep.subr.mxu0 0.0
  %697 = vmatpush1.msra.mxu0 0.0
  %698 = vmatprep.subr.mxu0 0.0
  %699 = vmatpush1.msra.mxu0 0.0
  %700 = vmatprep.subr.mxu0 0.0
  %701 = vmatpush1.msra.mxu0 0.0
  %702 = vmatprep.subr.mxu0 0.0
  %703 = vmatpush1.msra.mxu0 0.0
  %704 = vmatprep.subr.mxu0 0.0
  %705 = vmatpush1.msra.mxu0 0.0
  %706 = vmatprep.mubr.f32.mxu0 0.0
  %707 = vmatmul.mubr.f32.gmra.mrb[0].mxu0 %v499
  %v708 = vpop.f32.mrb[0].mxu0
  %v709 = vadd.f32 0.0, %v708
  %v710 = vpop.f32.mrb[0].mxu0
  %v711 = vadd.f32 0.0, %v710
  %712 = vdwg.mxu0
  %v713 = vadd.f32 %v503, %v638
  %v714 = vadd.f32 %v504, %v640
  %v715 = vadd.f32 %v505, %v709
  %v716 = vadd.f32 %v506, %v711
  %v717 = vxor.u32 %v713, 2147483648
  %v718 = vmul.f32 %v717, 1.442695
  %v719 = vpow.pop %v718
  %v720 = vadd.f32 %v719, 1.0
  %v721 = vrcp.pop %v720
  %v722 = vmul.f32 1.0, %v721
  %v723 = vxor.u32 %v714, 2147483648
  %v724 = vmul.f32 %v723, 1.442695
  %v725 = vpow.pop %v724
  %v726 = vadd.f32 %v725, 1.0
  %v727 = vrcp.pop %v726
  %v728 = vmul.f32 1.0, %v727
  %v729 = vtanh.pop %v715
  %v730 = vxor.u32 %v716, 2147483648
  %v731 = vmul.f32 %v730, 1.442695
  %v732 = vpow.pop %v731
  %v733 = vadd.f32 %v732, 1.0
  %v734 = vrcp.pop %v733
  %v735 = vmul.f32 1.0, %v734
  %v736 = vmul.f32 %v728, %v497
  %v737 = vmul.f32 %v722, %v729
  %v738 = vadd.f32 %v736, %v737
  %v739 = vtanh.pop %v738
  %v740 = vmul.f32 %v735, %v739
  %s741 = scalar_lea.vmem %s2, 16
  %742 = vst [vmem:[%s741] sm:$0xff] %v740
  %s743 = scalar_lea.vmem %s0, 96
  %v744 = vld [vmem:[%s743] sm:$0xff]
  %v745 = vld [vmem:[%s743 + $0x8] sm:$0xff]
  %v746 = vld [vmem:[%s743 + $0x10] sm:$0xff]
  %v747 = vld [vmem:[%s743 + $0x18] sm:$0xff]
  %v748 = vld [vmem:[%s1] sm:$0xff]
  %v749 = vld [vmem:[%s1 + $0x8] sm:$0xff]
  %v750 = vld [vmem:[%s1 + $0x10] sm:$0xff]
  %v751 = vld [vmem:[%s1 + $0x18] sm:$0xff]
  %v752 = vld [vmem:[%s1 + $0x20] sm:$0xff]
  %v753 = vld [vmem:[%s1 + $0x28] sm:$0xff]
  %v754 = vld [vmem:[%s1 + $0x30] sm:$0xff]
  %v755 = vld [vmem:[%s1 + $0x38] sm:$0xff]
  %v756 = vld [vmem:[%s1 + $0x40] sm:$0xff]
  %v757 = vld [vmem:[%s1 + $0x48] sm:$0xff]
  %v758 = vld [vmem:[%s1 + $0x50] sm:$0xff]
  %v759 = vld [vmem:[%s1 + $0x58] sm:$0xff]
  %v760 = vld [vmem:[%s1 + $0x60] sm:$0xff]
  %v761 = vld [vmem:[%s1 + $0x68] sm:$0xff]
  %v762 = vld [vmem:[%s1 + $0x70] sm:$0xff]
  %v763 = vld [vmem:[%s1 + $0x78] sm:$0xff]
  %v764 = vld [vmem:[%s1 + $0x80] sm:$0xff]
  %v765 = vld [vmem:[%s1 + $0x88] sm:$0xff]
  %v766 = vld [vmem:[%s1 + $0x90] sm:$0xff]
  %v767 = vld [vmem:[%s1 + $0x98] sm:$0xff]
  %v768 = vld [vmem:[%s1 + $0xa0] sm:$0xff]
  %v769 = vld [vmem:[%s1 + $0xa8] sm:$0xff]
  %v770 = vld [vmem:[%s1 + $0xb0] sm:$0xff]
  %v771 = vld [vmem:[%s1 + $0xb8] sm:$0xff]
  %v772 = vld [vmem:[%s1 + $0xc0] sm:$0xff]
  %v773 = vld [vmem:[%s1 + $0xc8] sm:$0xff]
  %v774 = vld [vmem:[%s1 + $0xd0] sm:$0xff]
  %v775 = vld [vmem:[%s1 + $0xd8] sm:$0xff]
  %v776 = vld [vmem:[%s1 + $0xe0] sm:$0xff]
  %v777 = vld [vmem:[%s1 + $0xe8] sm:$0xff]
  %v778 = vld [vmem:[%s1 + $0xf0] sm:$0xff]
  %v779 = vld [vmem:[%s1 + $0xf8] sm:$0xff]
  %v780 = vld [vmem:[%s1 + $0x100] sm:$0xff]
  %v781 = vld [vmem:[%s1 + $0x108] sm:$0xff]
  %v782 = vld [vmem:[%s1 + $0x110] sm:$0xff]
  %v783 = vld [vmem:[%s1 + $0x118] sm:$0xff]
  %v784 = vld [vmem:[%s1 + $0x120] sm:$0xff]
  %v785 = vld [vmem:[%s1 + $0x128] sm:$0xff]
  %v786 = vld [vmem:[%s1 + $0x130] sm:$0xff]
  %v787 = vld [vmem:[%s1 + $0x138] sm:$0xff]
  %v788 = vld [vmem:[%s1 + $0x140] sm:$0xff]
  %v789 = vld [vmem:[%s1 + $0x148] sm:$0xff]
  %v790 = vld [vmem:[%s1 + $0x150] sm:$0xff]
  %v791 = vld [vmem:[%s1 + $0x158] sm:$0xff]
  %v792 = vld [vmem:[%s1 + $0x160] sm:$0xff]
  %v793 = vld [vmem:[%s1 + $0x168] sm:$0xff]
  %v794 = vld [vmem:[%s1 + $0x170] sm:$0xff]
  %v795 = vld [vmem:[%s1 + $0x178] sm:$0xff]
  %v796 = vld [vmem:[%s1 + $0x180] sm:$0xff]
  %v797 = vld [vmem:[%s1 + $0x188] sm:$0xff]
  %v798 = vld [vmem:[%s1 + $0x190] sm:$0xff]
  %v799 = vld [vmem:[%s1 + $0x198] sm:$0xff]
  %v800 = vld [vmem:[%s1 + $0x1a0] sm:$0xff]
  %v801 = vld [vmem:[%s1 + $0x1a8] sm:$0xff]
  %v802 = vld [vmem:[%s1 + $0x1b0] sm:$0xff]
  %v803 = vld [vmem:[%s1 + $0x1b8] sm:$0xff]
  %v804 = vld [vmem:[%s1 + $0x1c0] sm:$0xff]
  %v805 = vld [vmem:[%s1 + $0x1c8] sm:$0xff]
  %v806 = vld [vmem:[%s1 + $0x1d0] sm:$0xff]
  %v807 = vld [vmem:[%s1 + $0x1d8] sm:$0xff]
  %v808 = vld [vmem:[%s1 + $0x1e0] sm:$0xff]
  %v809 = vld [vmem:[%s1 + $0x1e8] sm:$0xff]
  %v810 = vld [vmem:[%s1 + $0x1f0] sm:$0xff]
  %v811 = vld [vmem:[%s1 + $0x1f8] sm:$0xff]
  %812 = vmatprep.subr.mxu0 %v749
  %813 = vmatpush1.msra.mxu0 %v748
  %814 = vmatprep.subr.mxu0 %v753
  %815 = vmatpush1.msra.mxu0 %v752
  %816 = vmatprep.subr.mxu0 %v757
  %817 = vmatpush1.msra.mxu0 %v756
  %818 = vmatprep.subr.mxu0 %v761
  %819 = vmatpush1.msra.mxu0 %v760
  %820 = vmatprep.subr.mxu0 %v765
  %821 = vmatpush1.msra.mxu0 %v764
  %822 = vmatprep.subr.mxu0 %v769
  %823 = vmatpush1.msra.mxu0 %v768
  %824 = vmatprep.subr.mxu0 %v773
  %825 = vmatpush1.msra.mxu0 %v772
  %826 = vmatprep.subr.mxu0 %v777
  %827 = vmatpush1.msra.mxu0 %v776
  %828 = vmatprep.subr.mxu0 %v781
  %829 = vmatpush1.msra.mxu0 %v780
  %830 = vmatprep.subr.mxu0 %v785
  %831 = vmatpush1.msra.mxu0 %v784
  %832 = vmatprep.subr.mxu0 %v789
  %833 = vmatpush1.msra.mxu0 %v788
  %834 = vmatprep.subr.mxu0 %v793
  %835 = vmatpush1.msra.mxu0 %v792
  %836 = vmatprep.subr.mxu0 %v797
  %837 = vmatpush1.msra.mxu0 %v796
  %838 = vmatprep.subr.mxu0 %v801
  %839 = vmatpush1.msra.mxu0 %v800
  %840 = vmatprep.subr.mxu0 %v805
  %841 = vmatpush1.msra.mxu0 %v804
  %842 = vmatprep.subr.mxu0 %v809
  %843 = vmatpush1.msra.mxu0 %v808
  %844 = vmatprep.subr.mxu0 0.0
  %845 = vmatpush1.msra.mxu0 0.0
  %846 = vmatprep.subr.mxu0 0.0
  %847 = vmatpush1.msra.mxu0 0.0
  %848 = vmatprep.subr.mxu0 0.0
  %849 = vmatpush1.msra.mxu0 0.0
  %850 = vmatprep.subr.mxu0 0.0
  %851 = vmatpush1.msra.mxu0 0.0
  %852 = vmatprep.subr.mxu0 0.0
  %853 = vmatpush1.msra.mxu0 0.0
  %854 = vmatprep.subr.mxu0 0.0
  %855 = vmatpush1.msra.mxu0 0.0
  %856 = vmatprep.subr.mxu0 0.0
  %857 = vmatpush1.msra.mxu0 0.0
  %858 = vmatprep.subr.mxu0 0.0
  %859 = vmatpush1.msra.mxu0 0.0
  %860 = vmatprep.subr.mxu0 0.0
  %861 = vmatpush1.msra.mxu0 0.0
  %862 = vmatprep.subr.mxu0 0.0
  %863 = vmatpush1.msra.mxu0 0.0
  %864 = vmatprep.subr.mxu0 0.0
  %865 = vmatpush1.msra.mxu0 0.0
  %866 = vmatprep.subr.mxu0 0.0
  %867 = vmatpush1.msra.mxu0 0.0
  %868 = vmatprep.subr.mxu0 0.0
  %869 = vmatpush1.msra.mxu0 0.0
  %870 = vmatprep.subr.mxu0 0.0
  %871 = vmatpush1.msra.mxu0 0.0
  %872 = vmatprep.subr.mxu0 0.0
  %873 = vmatpush1.msra.mxu0 0.0
  %874 = vmatprep.subr.mxu0 0.0
  %875 = vmatpush1.msra.mxu0 0.0
  %876 = vmatprep.mubr.f32.mxu0 0.0
  %877 = vmatmul.mubr.f32.gmra.mrb[0].mxu0 %v740
  %v878 = vpop.f32.mrb[0].mxu0
  %v879 = vadd.f32 0.0, %v878
  %v880 = vpop.f32.mrb[0].mxu0
  %v881 = vadd.f32 0.0, %v880
  %882 = vdwg.mxu0
  %883 = vmatprep.subr.mxu0 %v751
  %884 = vmatpush1.msra.mxu0 %v750
  %885 = vmatprep.subr.mxu0 %v755
  %886 = vmatpush1.msra.mxu0 %v754
  %887 = vmatprep.subr.mxu0 %v759
  %888 = vmatpush1.msra.mxu0 %v758
  %889 = vmatprep.subr.mxu0 %v763
  %890 = vmatpush1.msra.mxu0 %v762
  %891 = vmatprep.subr.mxu0 %v767
  %892 = vmatpush1.msra.mxu0 %v766
  %893 = vmatprep.subr.mxu0 %v771
  %894 = vmatpush1.msra.mxu0 %v770
  %895 = vmatprep.subr.mxu0 %v775
  %896 = vmatpush1.msra.mxu0 %v774
  %897 = vmatprep.subr.mxu0 %v779
  %898 = vmatpush1.msra.mxu0 %v778
  %899 = vmatprep.subr.mxu0 %v783
  %900 = vmatpush1.msra.mxu0 %v782
  %901 = vmatprep.subr.mxu0 %v787
  %902 = vmatpush1.msra.mxu0 %v786
  %903 = vmatprep.subr.mxu0 %v791
  %904 = vmatpush1.msra.mxu0 %v790
  %905 = vmatprep.subr.mxu0 %v795
  %906 = vmatpush1.msra.mxu0 %v794
  %907 = vmatprep.subr.mxu0 %v799
  %908 = vmatpush1.msra.mxu0 %v798
  %909 = vmatprep.subr.mxu0 %v803
  %910 = vmatpush1.msra.mxu0 %v802
  %911 = vmatprep.subr.mxu0 %v807
  %912 = vmatpush1.msra.mxu0 %v806
  %913 = vmatprep.subr.mxu0 %v811
  %914 = vmatpush1.msra.mxu0 %v810
  %915 = vmatprep.subr.mxu0 0.0
  %916 = vmatpush1.msra.mxu0 0.0
  %917 = vmatprep.subr.mxu0 0.0
  %918 = vmatpush1.msra.mxu0 0.0
  %919 = vmatprep.subr.mxu0 0.0
  %920 = vmatpush1.msra.mxu0 0.0
  %921 = vmatprep.subr.mxu0 0.0
  %922 = vmatpush1.msra.mxu0 0.0
  %923 = vmatprep.subr.mxu0 0.0
  %924 = vmatpush1.msra.mxu0 0.0
  %925 = vmatprep.subr.mxu0 0.0
  %926 = vmatpush1.msra.mxu0 0.0
  %927 = vmatprep.subr.mxu0 0.0
  %928 = vmatpush1.msra.mxu0 0.0
  %929 = vmatprep.subr.mxu0 0.0
  %930 = vmatpush1.msra.mxu0 0.0
  %931 = vmatprep.subr.mxu0 0.0
  %932 = vmatpush1.msra.mxu0 0.0
  %933 = vmatprep.subr.mxu0 0.0
  %934 = vmatpush1.msra.mxu0 0.0
  %935 = vmatprep.subr.mxu0 0.0
  %936 = vmatpush1.msra.mxu0 0.0
  %937 = vmatprep.subr.mxu0 0.0
  %938 = vmatpush1.msra.mxu0 0.0
  %939 = vmatprep.subr.mxu0 0.0
  %940 = vmatpush1.msra.mxu0 0.0
  %941 = vmatprep.subr.mxu0 0.0
  %942 = vmatpush1.msra.mxu0 0.0
  %943 = vmatprep.subr.mxu0 0.0
  %944 = vmatpush1.msra.mxu0 0.0
  %945 = vmatprep.subr.mxu0 0.0
  %946 = vmatpush1.msra.mxu0 0.0
  %947 = vmatprep.mubr.f32.mxu0 0.0
  %948 = vmatmul.mubr.f32.gmra.mrb[0].mxu0 %v740
  %v949 = vpop.f32.mrb[0].mxu0
  %v950 = vadd.f32 0.0, %v949
  %v951 = vpop.f32.mrb[0].mxu0
  %v952 = vadd.f32 0.0, %v951
  %953 = vdwg.mxu0
  %v954 = vadd.f32 %v744, %v879
  %v955 = vadd.f32 %v745, %v881
  %v956 = vadd.f32 %v746, %v950
  %v957 = vadd.f32 %v747, %v952
  %v958 = vxor.u32 %v954, 2147483648
  %v959 = vmul.f32 %v958, 1.442695
  %v960 = vpow.pop %v959
  %v961 = vadd.f32 %v960, 1.0
  %v962 = vrcp.pop %v961
  %v963 = vmul.f32 1.0, %v962
  %v964 = vxor.u32 %v955, 2147483648
  %v965 = vmul.f32 %v964, 1.442695
  %v966 = vpow.pop %v965
  %v967 = vadd.f32 %v966, 1.0
  %v968 = vrcp.pop %v967
  %v969 = vmul.f32 1.0, %v968
  %v970 = vtanh.pop %v956
  %v971 = vxor.u32 %v957, 2147483648
  %v972 = vmul.f32 %v971, 1.442695
  %v973 = vpow.pop %v972
  %v974 = vadd.f32 %v973, 1.0
  %v975 = vrcp.pop %v974
  %v976 = vmul.f32 1.0, %v975
  %v977 = vmul.f32 %v969, %v738
  %v978 = vmul.f32 %v963, %v970
  %v979 = vadd.f32 %v977, %v978
  %v980 = vtanh.pop %v979
  %v981 = vmul.f32 %v976, %v980
  %s982 = scalar_lea.vmem %s2, 24
  %983 = vst [vmem:[%s982] sm:$0xff] %v981
  %s984 = scalar_lea.vmem %s0, 128
  %v985 = vld [vmem:[%s984] sm:$0xff]
  %v986 = vld [vmem:[%s984 + $0x8] sm:$0xff]
  %v987 = vld [vmem:[%s984 + $0x10] sm:$0xff]
  %v988 = vld [vmem:[%s984 + $0x18] sm:$0xff]
  %v989 = vld [vmem:[%s1] sm:$0xff]
  %v990 = vld [vmem:[%s1 + $0x8] sm:$0xff]
  %v991 = vld [vmem:[%s1 + $0x10] sm:$0xff]
  %v992 = vld [vmem:[%s1 + $0x18] sm:$0xff]
  %v993 = vld [vmem:[%s1 + $0x20] sm:$0xff]
  %v994 = vld [vmem:[%s1 + $0x28] sm:$0xff]
  %v995 = vld [vmem:[%s1 + $0x30] sm:$0xff]
  %v996 = vld [vmem:[%s1 + $0x38] sm:$0xff]
  %v997 = vld [vmem:[%s1 + $0x40] sm:$0xff]
  %v998 = vld [vmem:[%s1 + $0x48] sm:$0xff]
  %v999 = vld [vmem:[%s1 + $0x50] sm:$0xff]
  %v1000 = vld [vmem:[%s1 + $0x58] sm:$0xff]
  %v1001 = vld [vmem:[%s1 + $0x60] sm:$0xff]
  %v1002 = vld [vmem:[%s1 + $0x68] sm:$0xff]
  %v1003 = vld [vmem:[%s1 + $0x70] sm:$0xff]
  %v1004 = vld [vmem:[%s1 + $0x78] sm:$0xff]
  %v1005 = vld [vmem:[%s1 + $0x80] sm:$0xff]
  %v1006 = vld [vmem:[%s1 + $0x88] sm:$0xff]
  %v1007 = vld [vmem:[%s1 + $0x90] sm:$0xff]
  %v1008 = vld [vmem:[%s1 + $0x98] sm:$0xff]
  %v1009 = vld [vmem:[%s1 + $0xa0] sm:$0xff]
  %v1010 = vld [vmem:[%s1 + $0xa8] sm:$0xff]
  %v1011 = vld [vmem:[%s1 + $0xb0] sm:$0xff]
  %v1012 = vld [vmem:[%s1 + $0xb8] sm:$0xff]
  %v1013 = vld [vmem:[%s1 + $0xc0] sm:$0xff]
  %v1014 = vld [vmem:[%s1 + $0xc8] sm:$0xff]
  %v1015 = vld [vmem:[%s1 + $0xd0] sm:$0xff]
  %v1016 = vld [vmem:[%s1 + $0xd8] sm:$0xff]
  %v1017 = vld [vmem:[%s1 + $0xe0] sm:$0xff]
  %v1018 = vld [vmem:[%s1 + $0xe8] sm:$0xff]
  %v1019 = vld [vmem:[%s1 + $0xf0] sm:$0xff]
  %v1020 = vld [vmem:[%s1 + $0xf8] sm:$0xff]
  %v1021 = vld [vmem:[%s1 + $0x100] sm:$0xff]
  %v1022 = vld [vmem:[%s1 + $0x108] sm:$0xff]
  %v1023 = vld [vmem:[%s1 + $0x110] sm:$0xff]
  %v1024 = vld [vmem:[%s1 + $0x118] sm:$0xff]
  %v1025 = vld [vmem:[%s1 + $0x120] sm:$0xff]
  %v1026 = vld [vmem:[%s1 + $0x128] sm:$0xff]
  %v1027 = vld [vmem:[%s1 + $0x130] sm:$0xff]
  %v1028 = vld [vmem:[%s1 + $0x138] sm:$0xff]
  %v1029 = vld [vmem:[%s1 + $0x140] sm:$0xff]
  %v1030 = vld [vmem:[%s1 + $0x148] sm:$0xff]
  %v1031 = vld [vmem:[%s1 + $0x150] sm:$0xff]
  %v1032 = vld [vmem:[%s1 + $0x158] sm:$0xff]
  %v1033 = vld [vmem:[%s1 + $0x160] sm:$0xff]
  %v1034 = vld [vmem:[%s1 + $0x168] sm:$0xff]
  %v1035 = vld [vmem:[%s1 + $0x170] sm:$0xff]
  %v1036 = vld [vmem:[%s1 + $0x178] sm:$0xff]
  %v1037 = vld [vmem:[%s1 + $0x180] sm:$0xff]
  %v1038 = vld [vmem:[%s1 + $0x188] sm:$0xff]
  %v1039 = vld [vmem:[%s1 + $0x190] sm:$0xff]
  %v1040 = vld [vmem:[%s1 + $0x198] sm:$0xff]
  %v1041 = vld [vmem:[%s1 + $0x1a0] sm:$0xff]
  %v1042 = vld [vmem:[%s1 + $0x1a8] sm:$0xff]
  %v1043 = vld [vmem:[%s1 + $0x1b0] sm:$0xff]
  %v1044 = vld [vmem:[%s1 + $0x1b8] sm:$0xff]
  %v1045 = vld [vmem:[%s1 + $0x1c0] sm:$0xff]
  %v1046 = vld [vmem:[%s1 + $0x1c8] sm:$0xff]
  %v1047 = vld [vmem:[%s1 + $0x1d0] sm:$0xff]
  %v1048 = vld [vmem:[%s1 + $0x1d8] sm:$0xff]
  %v1049 = vld [vmem:[%s1 + $0x1e0] sm:$0xff]
  %v1050 = vld [vmem:[%s1 + $0x1e8] sm:$0xff]
  %v1051 = vld [vmem:[%s1 + $0x1f0] sm:$0xff]
  %v1052 = vld [vmem:[%s1 + $0x1f8] sm:$0xff]
  %1053 = vmatprep.subr.mxu0 %v990
  %1054 = vmatpush1.msra.mxu0 %v989
  %1055 = vmatprep.subr.mxu0 %v994
  %1056 = vmatpush1.msra.mxu0 %v993
  %1057 = vmatprep.subr.mxu0 %v998
  %1058 = vmatpush1.msra.mxu0 %v997
  %1059 = vmatprep.subr.mxu0 %v1002
  %1060 = vmatpush1.msra.mxu0 %v1001
  %1061 = vmatprep.subr.mxu0 %v1006
  %1062 = vmatpush1.msra.mxu0 %v1005
  %1063 = vmatprep.subr.mxu0 %v1010
  %1064 = vmatpush1.msra.mxu0 %v1009
  %1065 = vmatprep.subr.mxu0 %v1014
  %1066 = vmatpush1.msra.mxu0 %v1013
  %1067 = vmatprep.subr.mxu0 %v1018
  %1068 = vmatpush1.msra.mxu0 %v1017
  %1069 = vmatprep.subr.mxu0 %v1022
  %1070 = vmatpush1.msra.mxu0 %v1021
  %1071 = vmatprep.subr.mxu0 %v1026
  %1072 = vmatpush1.msra.mxu0 %v1025
  %1073 = vmatprep.subr.mxu0 %v1030
  %1074 = vmatpush1.msra.mxu0 %v1029
  %1075 = vmatprep.subr.mxu0 %v1034
  %1076 = vmatpush1.msra.mxu0 %v1033
  %1077 = vmatprep.subr.mxu0 %v1038
  %1078 = vmatpush1.msra.mxu0 %v1037
  %1079 = vmatprep.subr.mxu0 %v1042
  %1080 = vmatpush1.msra.mxu0 %v1041
  %1081 = vmatprep.subr.mxu0 %v1046
  %1082 = vmatpush1.msra.mxu0 %v1045
  %1083 = vmatprep.subr.mxu0 %v1050
  %1084 = vmatpush1.msra.mxu0 %v1049
  %1085 = vmatprep.subr.mxu0 0.0
  %1086 = vmatpush1.msra.mxu0 0.0
  %1087 = vmatprep.subr.mxu0 0.0
  %1088 = vmatpush1.msra.mxu0 0.0
  %1089 = vmatprep.subr.mxu0 0.0
  %1090 = vmatpush1.msra.mxu0 0.0
  %1091 = vmatprep.subr.mxu0 0.0
  %1092 = vmatpush1.msra.mxu0 0.0
  %1093 = vmatprep.subr.mxu0 0.0
  %1094 = vmatpush1.msra.mxu0 0.0
  %1095 = vmatprep.subr.mxu0 0.0
  %1096 = vmatpush1.msra.mxu0 0.0
  %1097 = vmatprep.subr.mxu0 0.0
  %1098 = vmatpush1.msra.mxu0 0.0
  %1099 = vmatprep.subr.mxu0 0.0
  %1100 = vmatpush1.msra.mxu0 0.0
  %1101 = vmatprep.subr.mxu0 0.0
  %1102 = vmatpush1.msra.mxu0 0.0
  %1103 = vmatprep.subr.mxu0 0.0
  %1104 = vmatpush1.msra.mxu0 0.0
  %1105 = vmatprep.subr.mxu0 0.0
  %1106 = vmatpush1.msra.mxu0 0.0
  %1107 = vmatprep.subr.mxu0 0.0
  %1108 = vmatpush1.msra.mxu0 0.0
  %1109 = vmatprep.subr.mxu0 0.0
  %1110 = vmatpush1.msra.mxu0 0.0
  %1111 = vmatprep.subr.mxu0 0.0
  %1112 = vmatpush1.msra.mxu0 0.0
  %1113 = vmatprep.subr.mxu0 0.0
  %1114 = vmatpush1.msra.mxu0 0.0
  %1115 = vmatprep.subr.mxu0 0.0
  %1116 = vmatpush1.msra.mxu0 0.0
  %1117 = vmatprep.mubr.f32.mxu0 0.0
  %1118 = vmatmul.mubr.f32.gmra.mrb[0].mxu0 %v981
  %v1119 = vpop.f32.mrb[0].mxu0
  %v1120 = vadd.f32 0.0, %v1119
  %v1121 = vpop.f32.mrb[0].mxu0
  %v1122 = vadd.f32 0.0, %v1121
  %1123 = vdwg.mxu0
  %1124 = vmatprep.subr.mxu0 %v992
  %1125 = vmatpush1.msra.mxu0 %v991
  %1126 = vmatprep.subr.mxu0 %v996
  %1127 = vmatpush1.msra.mxu0 %v995
  %1128 = vmatprep.subr.mxu0 %v1000
  %1129 = vmatpush1.msra.mxu0 %v999
  %1130 = vmatprep.subr.mxu0 %v1004
  %1131 = vmatpush1.msra.mxu0 %v1003
  %1132 = vmatprep.subr.mxu0 %v1008
  %1133 = vmatpush1.msra.mxu0 %v1007
  %1134 = vmatprep.subr.mxu0 %v1012
  %1135 = vmatpush1.msra.mxu0 %v1011
  %1136 = vmatprep.subr.mxu0 %v1016
  %1137 = vmatpush1.msra.mxu0 %v1015
  %1138 = vmatprep.subr.mxu0 %v1020
  %1139 = vmatpush1.msra.mxu0 %v1019
  %1140 = vmatprep.subr.mxu0 %v1024
  %1141 = vmatpush1.msra.mxu0 %v1023
  %1142 = vmatprep.subr.mxu0 %v1028
  %1143 = vmatpush1.msra.mxu0 %v1027
  %1144 = vmatprep.subr.mxu0 %v1032
  %1145 = vmatpush1.msra.mxu0 %v1031
  %1146 = vmatprep.subr.mxu0 %v1036
  %1147 = vmatpush1.msra.mxu0 %v1035
  %1148 = vmatprep.subr.mxu0 %v1040
  %1149 = vmatpush1.msra.mxu0 %v1039
  %1150 = vmatprep.subr.mxu0 %v1044
  %1151 = vmatpush1.msra.mxu0 %v1043
  %1152 = vmatprep.subr.mxu0 %v1048
  %1153 = vmatpush1.msra.mxu0 %v1047
  %1154 = vmatprep.subr.mxu0 %v1052
  %1155 = vmatpush1.msra.mxu0 %v1051
  %1156 = vmatprep.subr.mxu0 0.0
  %1157 = vmatpush1.msra.mxu0 0.0
  %1158 = vmatprep.subr.mxu0 0.0
  %1159 = vmatpush1.msra.mxu0 0.0
  %1160 = vmatprep.subr.mxu0 0.0
  %1161 = vmatpush1.msra.mxu0 0.0
  %1162 = vmatprep.subr.mxu0 0.0
  %1163 = vmatpush1.msra.mxu0 0.0
  %1164 = vmatprep.subr.mxu0 0.0
  %1165 = vmatpush1.msra.mxu0 0.0
  %1166 = vmatprep.subr.mxu0 0.0
  %1167 = vmatpush1.msra.mxu0 0.0
  %1168 = vmatprep.subr.mxu0 0.0
  %1169 = vmatpush1.msra.mxu0 0.0
  %1170 = vmatprep.subr.mxu0 0.0
  %1171 = vmatpush1.msra.mxu0 0.0
  %1172 = vmatprep.subr.mxu0 0.0
  %1173 = vmatpush1.msra.mxu0 0.0
  %1174 = vmatprep.subr.mxu0 0.0
  %1175 = vmatpush1.msra.mxu0 0.0
  %1176 = vmatprep.subr.mxu0 0.0
  %1177 = vmatpush1.msra.mxu0 0.0
  %1178 = vmatprep.subr.mxu0 0.0
  %1179 = vmatpush1.msra.mxu0 0.0
  %1180 = vmatprep.subr.mxu0 0.0
  %1181 = vmatpush1.msra.mxu0 0.0
  %1182 = vmatprep.subr.mxu0 0.0
  %1183 = vmatpush1.msra.mxu0 0.0
  %1184 = vmatprep.subr.mxu0 0.0
  %1185 = vmatpush1.msra.mxu0 0.0
  %1186 = vmatprep.subr.mxu0 0.0
  %1187 = vmatpush1.msra.mxu0 0.0
  %1188 = vmatprep.mubr.f32.mxu0 0.0
  %1189 = vmatmul.mubr.f32.gmra.mrb[0].mxu0 %v981
  %v1190 = vpop.f32.mrb[0].mxu0
  %v1191 = vadd.f32 0.0, %v1190
  %v1192 = vpop.f32.mrb[0].mxu0
  %v1193 = vadd.f32 0.0, %v1192
  %1194 = vdwg.mxu0
  %v1195 = vadd.f32 %v985, %v1120
  %v1196 = vadd.f32 %v986, %v1122
  %v1197 = vadd.f32 %v987, %v1191
  %v1198 = vadd.f32 %v988, %v1193
  %v1199 = vxor.u32 %v1195, 2147483648
  %v1200 = vmul.f32 %v1199, 1.442695
  %v1201 = vpow.pop %v1200
  %v1202 = vadd.f32 %v1201, 1.0
  %v1203 = vrcp.pop %v1202
  %v1204 = vmul.f32 1.0, %v1203
  %v1205 = vxor.u32 %v1196, 2147483648
  %v1206 = vmul.f32 %v1205, 1.442695
  %v1207 = vpow.pop %v1206
  %v1208 = vadd.f32 %v1207, 1.0
  %v1209 = vrcp.pop %v1208
  %v1210 = vmul.f32 1.0, %v1209
  %v1211 = vtanh.pop %v1197
  %v1212 = vxor.u32 %v1198, 2147483648
  %v1213 = vmul.f32 %v1212, 1.442695
  %v1214 = vpow.pop %v1213
  %v1215 = vadd.f32 %v1214, 1.0
  %v1216 = vrcp.pop %v1215
  %v1217 = vmul.f32 1.0, %v1216
  %v1218 = vmul.f32 %v1210, %v979
  %v1219 = vmul.f32 %v1204, %v1211
  %v1220 = vadd.f32 %v1218, %v1219
  %v1221 = vtanh.pop %v1220
  %v1222 = vmul.f32 %v1217, %v1221
  %s1223 = scalar_lea.vmem %s2, 32
  %1224 = vst [vmem:[%s1223] sm:$0xff] %v1222
  %s1225 = scalar_lea.vmem %s0, 160
  %v1226 = vld [vmem:[%s1225] sm:$0xff]
  %v1227 = vld [vmem:[%s1225 + $0x8] sm:$0xff]
  %v1228 = vld [vmem:[%s1225 + $0x10] sm:$0xff]
  %v1229 = vld [vmem:[%s1225 + $0x18] sm:$0xff]
  %v1230 = vld [vmem:[%s1] sm:$0xff]
  %v1231 = vld [vmem:[%s1 + $0x8] sm:$0xff]
  %v1232 = vld [vmem:[%s1 + $0x10] sm:$0xff]
  %v1233 = vld [vmem:[%s1 + $0x18] sm:$0xff]
  %v1234 = vld [vmem:[%s1 + $0x20] sm:$0xff]
  %v1235 = vld [vmem:[%s1 + $0x28] sm:$0xff]
  %v1236 = vld [vmem:[%s1 + $0x30] sm:$0xff]
  %v1237 = vld [vmem:[%s1 + $0x38] sm:$0xff]
  %v1238 = vld [vmem:[%s1 + $0x40] sm:$0xff]
  %v1239 = vld [vmem:[%s1 + $0x48] sm:$0xff]
  %v1240 = vld [vmem:[%s1 + $0x50] sm:$0xff]
  %v1241 = vld [vmem:[%s1 + $0x58] sm:$0xff]
  %v1242 = vld [vmem:[%s1 + $0x60] sm:$0xff]
  %v1243 = vld [vmem:[%s1 + $0x68] sm:$0xff]
  %v1244 = vld [vmem:[%s1 + $0x70] sm:$0xff]
  %v1245 = vld [vmem:[%s1 + $0x78] sm:$0xff]
  %v1246 = vld [vmem:[%s1 + $0x80] sm:$0xff]
  %v1247 = vld [vmem:[%s1 + $0x88] sm:$0xff]
  %v1248 = vld [vmem:[%s1 + $0x90] sm:$0xff]
  %v1249 = vld [vmem:[%s1 + $0x98] sm:$0xff]
  %v1250 = vld [vmem:[%s1 + $0xa0] sm:$0xff]
  %v1251 = vld [vmem:[%s1 + $0xa8] sm:$0xff]
  %v1252 = vld [vmem:[%s1 + $0xb0] sm:$0xff]
  %v1253 = vld [vmem:[%s1 + $0xb8] sm:$0xff]
  %v1254 = vld [vmem:[%s1 + $0xc0] sm:$0xff]
  %v1255 = vld [vmem:[%s1 + $0xc8] sm:$0xff]
  %v1256 = vld [vmem:[%s1 + $0xd0] sm:$0xff]
  %v1257 = vld [vmem:[%s1 + $0xd8] sm:$0xff]
  %v1258 = vld [vmem:[%s1 + $0xe0] sm:$0xff]
  %v1259 = vld [vmem:[%s1 + $0xe8] sm:$0xff]
  %v1260 = vld [vmem:[%s1 + $0xf0] sm:$0xff]
  %v1261 = vld [vmem:[%s1 + $0xf8] sm:$0xff]
  %v1262 = vld [vmem:[%s1 + $0x100] sm:$0xff]
  %v1263 = vld [vmem:[%s1 + $0x108] sm:$0xff]
  %v1264 = vld [vmem:[%s1 + $0x110] sm:$0xff]
  %v1265 = vld [vmem:[%s1 + $0x118] sm:$0xff]
  %v1266 = vld [vmem:[%s1 + $0x120] sm:$0xff]
  %v1267 = vld [vmem:[%s1 + $0x128] sm:$0xff]
  %v1268 = vld [vmem:[%s1 + $0x130] sm:$0xff]
  %v1269 = vld [vmem:[%s1 + $0x138] sm:$0xff]
  %v1270 = vld [vmem:[%s1 + $0x140] sm:$0xff]
  %v1271 = vld [vmem:[%s1 + $0x148] sm:$0xff]
  %v1272 = vld [vmem:[%s1 + $0x150] sm:$0xff]
  %v1273 = vld [vmem:[%s1 + $0x158] sm:$0xff]
  %v1274 = vld [vmem:[%s1 + $0x160] sm:$0xff]
  %v1275 = vld [vmem:[%s1 + $0x168] sm:$0xff]
  %v1276 = vld [vmem:[%s1 + $0x170] sm:$0xff]
  %v1277 = vld [vmem:[%s1 + $0x178] sm:$0xff]
  %v1278 = vld [vmem:[%s1 + $0x180] sm:$0xff]
  %v1279 = vld [vmem:[%s1 + $0x188] sm:$0xff]
  %v1280 = vld [vmem:[%s1 + $0x190] sm:$0xff]
  %v1281 = vld [vmem:[%s1 + $0x198] sm:$0xff]
  %v1282 = vld [vmem:[%s1 + $0x1a0] sm:$0xff]
  %v1283 = vld [vmem:[%s1 + $0x1a8] sm:$0xff]
  %v1284 = vld [vmem:[%s1 + $0x1b0] sm:$0xff]
  %v1285 = vld [vmem:[%s1 + $0x1b8] sm:$0xff]
  %v1286 = vld [vmem:[%s1 + $0x1c0] sm:$0xff]
  %v1287 = vld [vmem:[%s1 + $0x1c8] sm:$0xff]
  %v1288 = vld [vmem:[%s1 + $0x1d0] sm:$0xff]
  %v1289 = vld [vmem:[%s1 + $0x1d8] sm:$0xff]
  %v1290 = vld [vmem:[%s1 + $0x1e0] sm:$0xff]
  %v1291 = vld [vmem:[%s1 + $0x1e8] sm:$0xff]
  %v1292 = vld [vmem:[%s1 + $0x1f0] sm:$0xff]
  %v1293 = vld [vmem:[%s1 + $0x1f8] sm:$0xff]
  %1294 = vmatprep.subr.mxu0 %v1231
  %1295 = vmatpush1.msra.mxu0 %v1230
  %1296 = vmatprep.subr.mxu0 %v1235
  %1297 = vmatpush1.msra.mxu0 %v1234
  %1298 = vmatprep.subr.mxu0 %v1239
  %1299 = vmatpush1.msra.mxu0 %v1238
  %1300 = vmatprep.subr.mxu0 %v1243
  %1301 = vmatpush1.msra.mxu0 %v1242
  %1302 = vmatprep.subr.mxu0 %v1247
  %1303 = vmatpush1.msra.mxu0 %v1246
  %1304 = vmatprep.subr.mxu0 %v1251
  %1305 = vmatpush1.msra.mxu0 %v1250
  %1306 = vmatprep.subr.mxu0 %v1255
  %1307 = vmatpush1.msra.mxu0 %v1254
  %1308 = vmatprep.subr.mxu0 %v1259
  %1309 = vmatpush1.msra.mxu0 %v1258
  %1310 = vmatprep.subr.mxu0 %v1263
  %1311 = vmatpush1.msra.mxu0 %v1262
  %1312 = vmatprep.subr.mxu0 %v1267
  %1313 = vmatpush1.msra.mxu0 %v1266
  %1314 = vmatprep.subr.mxu0 %v1271
  %1315 = vmatpush1.msra.mxu0 %v1270
  %1316 = vmatprep.subr.mxu0 %v1275
  %1317 = vmatpush1.msra.mxu0 %v1274
  %1318 = vmatprep.subr.mxu0 %v1279
  %1319 = vmatpush1.msra.mxu0 %v1278
  %1320 = vmatprep.subr.mxu0 %v1283
  %1321 = vmatpush1.msra.mxu0 %v1282
  %1322 = vmatprep.subr.mxu0 %v1287
  %1323 = vmatpush1.msra.mxu0 %v1286
  %1324 = vmatprep.subr.mxu0 %v1291
  %1325 = vmatpush1.msra.mxu0 %v1290
  %1326 = vmatprep.subr.mxu0 0.0
  %1327 = vmatpush1.msra.mxu0 0.0
  %1328 = vmatprep.subr.mxu0 0.0
  %1329 = vmatpush1.msra.mxu0 0.0
  %1330 = vmatprep.subr.mxu0 0.0
  %1331 = vmatpush1.msra.mxu0 0.0
  %1332 = vmatprep.subr.mxu0 0.0
  %1333 = vmatpush1.msra.mxu0 0.0
  %1334 = vmatprep.subr.mxu0 0.0
  %1335 = vmatpush1.msra.mxu0 0.0
  %1336 = vmatprep.subr.mxu0 0.0
  %1337 = vmatpush1.msra.mxu0 0.0
  %1338 = vmatprep.subr.mxu0 0.0
  %1339 = vmatpush1.msra.mxu0 0.0
  %1340 = vmatprep.subr.mxu0 0.0
  %1341 = vmatpush1.msra.mxu0 0.0
  %1342 = vmatprep.subr.mxu0 0.0
  %1343 = vmatpush1.msra.mxu0 0.0
  %1344 = vmatprep.subr.mxu0 0.0
  %1345 = vmatpush1.msra.mxu0 0.0
  %1346 = vmatprep.subr.mxu0 0.0
  %1347 = vmatpush1.msra.mxu0 0.0
  %1348 = vmatprep.subr.mxu0 0.0
  %1349 = vmatpush1.msra.mxu0 0.0
  %1350 = vmatprep.subr.mxu0 0.0
  %1351 = vmatpush1.msra.mxu0 0.0
  %1352 = vmatprep.subr.mxu0 0.0
  %1353 = vmatpush1.msra.mxu0 0.0
  %1354 = vmatprep.subr.mxu0 0.0
  %1355 = vmatpush1.msra.mxu0 0.0
  %1356 = vmatprep.subr.mxu0 0.0
  %1357 = vmatpush1.msra.mxu0 0.0
  %1358 = vmatprep.mubr.f32.mxu0 0.0
  %1359 = vmatmul.mubr.f32.gmra.mrb[0].mxu0 %v1222
  %v1360 = vpop.f32.mrb[0].mxu0
  %v1361 = vadd.f32 0.0, %v1360
  %v1362 = vpop.f32.mrb[0].mxu0
  %v1363 = vadd.f32 0.0, %v1362
  %1364 = vdwg.mxu0
  %1365 = vmatprep.subr.mxu0 %v1233
  %1366 = vmatpush1.msra.mxu0 %v1232
  %1367 = vmatprep.subr.mxu0 %v1237
  %1368 = vmatpush1.msra.mxu0 %v1236
  %1369 = vmatprep.subr.mxu0 %v1241
  %1370 = vmatpush1.msra.mxu0 %v1240
  %1371 = vmatprep.subr.mxu0 %v1245
  %1372 = vmatpush1.msra.mxu0 %v1244
  %1373 = vmatprep.subr.mxu0 %v1249
  %1374 = vmatpush1.msra.mxu0 %v1248
  %1375 = vmatprep.subr.mxu0 %v1253
  %1376 = vmatpush1.msra.mxu0 %v1252
  %1377 = vmatprep.subr.mxu0 %v1257
  %1378 = vmatpush1.msra.mxu0 %v1256
  %1379 = vmatprep.subr.mxu0 %v1261
  %1380 = vmatpush1.msra.mxu0 %v1260
  %1381 = vmatprep.subr.mxu0 %v1265
  %1382 = vmatpush1.msra.mxu0 %v1264
  %1383 = vmatprep.subr.mxu0 %v1269
  %1384 = vmatpush1.msra.mxu0 %v1268
  %1385 = vmatprep.subr.mxu0 %v1273
  %1386 = vmatpush1.msra.mxu0 %v1272
  %1387 = vmatprep.subr.mxu0 %v1277
  %1388 = vmatpush1.msra.mxu0 %v1276
  %1389 = vmatprep.subr.mxu0 %v1281
  %1390 = vmatpush1.msra.mxu0 %v1280
  %1391 = vmatprep.subr.mxu0 %v1285
  %1392 = vmatpush1.msra.mxu0 %v1284
  %1393 = vmatprep.subr.mxu0 %v1289
  %1394 = vmatpush1.msra.mxu0 %v1288
  %1395 = vmatprep.subr.mxu0 %v1293
  %1396 = vmatpush1.msra.mxu0 %v1292
  %1397 = vmatprep.subr.mxu0 0.0
  %1398 = vmatpush1.msra.mxu0 0.0
  %1399 = vmatprep.subr.mxu0 0.0
  %1400 = vmatpush1.msra.mxu0 0.0
  %1401 = vmatprep.subr.mxu0 0.0
  %1402 = vmatpush1.msra.mxu0 0.0
  %1403 = vmatprep.subr.mxu0 0.0
  %1404 = vmatpush1.msra.mxu0 0.0
  %1405 = vmatprep.subr.mxu0 0.0
  %1406 = vmatpush1.msra.mxu0 0.0
  %1407 = vmatprep.subr.mxu0 0.0
  %1408 = vmatpush1.msra.mxu0 0.0
  %1409 = vmatprep.subr.mxu0 0.0
  %1410 = vmatpush1.msra.mxu0 0.0
  %1411 = vmatprep.subr.mxu0 0.0
  %1412 = vmatpush1.msra.mxu0 0.0
  %1413 = vmatprep.subr.mxu0 0.0
  %1414 = vmatpush1.msra.mxu0 0.0
  %1415 = vmatprep.subr.mxu0 0.0
  %1416 = vmatpush1.msra.mxu0 0.0
  %1417 = vmatprep.subr.mxu0 0.0
  %1418 = vmatpush1.msra.mxu0 0.0
  %1419 = vmatprep.subr.mxu0 0.0
  %1420 = vmatpush1.msra.mxu0 0.0
  %1421 = vmatprep.subr.mxu0 0.0
  %1422 = vmatpush1.msra.mxu0 0.0
  %1423 = vmatprep.subr.mxu0 0.0
  %1424 = vmatpush1.msra.mxu0 0.0
  %1425 = vmatprep.subr.mxu0 0.0
  %1426 = vmatpush1.msra.mxu0 0.0
  %1427 = vmatprep.subr.mxu0 0.0
  %1428 = vmatpush1.msra.mxu0 0.0
  %1429 = vmatprep.mubr.f32.mxu0 0.0
  %1430 = vmatmul.mubr.f32.gmra.mrb[0].mxu0 %v1222
  %v1431 = vpop.f32.mrb[0].mxu0
  %v1432 = vadd.f32 0.0, %v1431
  %v1433 = vpop.f32.mrb[0].mxu0
  %v1434 = vadd.f32 0.0, %v1433
  %1435 = vdwg.mxu0
  %v1436 = vadd.f32 %v1226, %v1361
  %v1437 = vadd.f32 %v1227, %v1363
  %v1438 = vadd.f32 %v1228, %v1432
  %v1439 = vadd.f32 %v1229, %v1434
  %v1440 = vxor.u32 %v1436, 2147483648
  %v1441 = vmul.f32 %v1440, 1.442695
  %v1442 = vpow.pop %v1441
  %v1443 = vadd.f32 %v1442, 1.0
  %v1444 = vrcp.pop %v1443
  %v1445 = vmul.f32 1.0, %v1444
  %v1446 = vxor.u32 %v1437, 2147483648
  %v1447 = vmul.f32 %v1446, 1.442695
  %v1448 = vpow.pop %v1447
  %v1449 = vadd.f32 %v1448, 1.0
  %v1450 = vrcp.pop %v1449
  %v1451 = vmul.f32 1.0, %v1450
  %v1452 = vtanh.pop %v1438
  %v1453 = vxor.u32 %v1439, 2147483648
  %v1454 = vmul.f32 %v1453, 1.442695
  %v1455 = vpow.pop %v1454
  %v1456 = vadd.f32 %v1455, 1.0
  %v1457 = vrcp.pop %v1456
  %v1458 = vmul.f32 1.0, %v1457
  %v1459 = vmul.f32 %v1451, %v1220
  %v1460 = vmul.f32 %v1445, %v1452
  %v1461 = vadd.f32 %v1459, %v1460
  %v1462 = vtanh.pop %v1461
  %v1463 = vmul.f32 %v1458, %v1462
  %s1464 = scalar_lea.vmem %s2, 40
  %1465 = vst [vmem:[%s1464] sm:$0xff] %v1463
  %s1466 = scalar_lea.vmem %s0, 192
  %v1467 = vld [vmem:[%s1466] sm:$0xff]
  %v1468 = vld [vmem:[%s1466 + $0x8] sm:$0xff]
  %v1469 = vld [vmem:[%s1466 + $0x10] sm:$0xff]
  %v1470 = vld [vmem:[%s1466 + $0x18] sm:$0xff]
  %v1471 = vld [vmem:[%s1] sm:$0xff]
  %v1472 = vld [vmem:[%s1 + $0x8] sm:$0xff]
  %v1473 = vld [vmem:[%s1 + $0x10] sm:$0xff]
  %v1474 = vld [vmem:[%s1 + $0x18] sm:$0xff]
  %v1475 = vld [vmem:[%s1 + $0x20] sm:$0xff]
  %v1476 = vld [vmem:[%s1 + $0x28] sm:$0xff]
  %v1477 = vld [vmem:[%s1 + $0x30] sm:$0xff]
  %v1478 = vld [vmem:[%s1 + $0x38] sm:$0xff]
  %v1479 = vld [vmem:[%s1 + $0x40] sm:$0xff]
  %v1480 = vld [vmem:[%s1 + $0x48] sm:$0xff]
  %v1481 = vld [vmem:[%s1 + $0x50] sm:$0xff]
  %v1482 = vld [vmem:[%s1 + $0x58] sm:$0xff]
  %v1483 = vld [vmem:[%s1 + $0x60] sm:$0xff]
  %v1484 = vld [vmem:[%s1 + $0x68] sm:$0xff]
  %v1485 = vld [vmem:[%s1 + $0x70] sm:$0xff]
  %v1486 = vld [vmem:[%s1 + $0x78] sm:$0xff]
  %v1487 = vld [vmem:[%s1 + $0x80] sm:$0xff]
  %v1488 = vld [vmem:[%s1 + $0x88] sm:$0xff]
  %v1489 = vld [vmem:[%s1 + $0x90] sm:$0xff]
  %v1490 = vld [vmem:[%s1 + $0x98] sm:$0xff]
  %v1491 = vld [vmem:[%s1 + $0xa0] sm:$0xff]
  %v1492 = vld [vmem:[%s1 + $0xa8] sm:$0xff]
  %v1493 = vld [vmem:[%s1 + $0xb0] sm:$0xff]
  %v1494 = vld [vmem:[%s1 + $0xb8] sm:$0xff]
  %v1495 = vld [vmem:[%s1 + $0xc0] sm:$0xff]
  %v1496 = vld [vmem:[%s1 + $0xc8] sm:$0xff]
  %v1497 = vld [vmem:[%s1 + $0xd0] sm:$0xff]
  %v1498 = vld [vmem:[%s1 + $0xd8] sm:$0xff]
  %v1499 = vld [vmem:[%s1 + $0xe0] sm:$0xff]
  %v1500 = vld [vmem:[%s1 + $0xe8] sm:$0xff]
  %v1501 = vld [vmem:[%s1 + $0xf0] sm:$0xff]
  %v1502 = vld [vmem:[%s1 + $0xf8] sm:$0xff]
  %v1503 = vld [vmem:[%s1 + $0x100] sm:$0xff]
  %v1504 = vld [vmem:[%s1 + $0x108] sm:$0xff]
  %v1505 = vld [vmem:[%s1 + $0x110] sm:$0xff]
  %v1506 = vld [vmem:[%s1 + $0x118] sm:$0xff]
  %v1507 = vld [vmem:[%s1 + $0x120] sm:$0xff]
  %v1508 = vld [vmem:[%s1 + $0x128] sm:$0xff]
  %v1509 = vld [vmem:[%s1 + $0x130] sm:$0xff]
  %v1510 = vld [vmem:[%s1 + $0x138] sm:$0xff]
  %v1511 = vld [vmem:[%s1 + $0x140] sm:$0xff]
  %v1512 = vld [vmem:[%s1 + $0x148] sm:$0xff]
  %v1513 = vld [vmem:[%s1 + $0x150] sm:$0xff]
  %v1514 = vld [vmem:[%s1 + $0x158] sm:$0xff]
  %v1515 = vld [vmem:[%s1 + $0x160] sm:$0xff]
  %v1516 = vld [vmem:[%s1 + $0x168] sm:$0xff]
  %v1517 = vld [vmem:[%s1 + $0x170] sm:$0xff]
  %v1518 = vld [vmem:[%s1 + $0x178] sm:$0xff]
  %v1519 = vld [vmem:[%s1 + $0x180] sm:$0xff]
  %v1520 = vld [vmem:[%s1 + $0x188] sm:$0xff]
  %v1521 = vld [vmem:[%s1 + $0x190] sm:$0xff]
  %v1522 = vld [vmem:[%s1 + $0x198] sm:$0xff]
  %v1523 = vld [vmem:[%s1 + $0x1a0] sm:$0xff]
  %v1524 = vld [vmem:[%s1 + $0x1a8] sm:$0xff]
  %v1525 = vld [vmem:[%s1 + $0x1b0] sm:$0xff]
  %v1526 = vld [vmem:[%s1 + $0x1b8] sm:$0xff]
  %v1527 = vld [vmem:[%s1 + $0x1c0] sm:$0xff]
  %v1528 = vld [vmem:[%s1 + $0x1c8] sm:$0xff]
  %v1529 = vld [vmem:[%s1 + $0x1d0] sm:$0xff]
  %v1530 = vld [vmem:[%s1 + $0x1d8] sm:$0xff]
  %v1531 = vld [vmem:[%s1 + $0x1e0] sm:$0xff]
  %v1532 = vld [vmem:[%s1 + $0x1e8] sm:$0xff]
  %v1533 = vld [vmem:[%s1 + $0x1f0] sm:$0xff]
  %v1534 = vld [vmem:[%s1 + $0x1f8] sm:$0xff]
  %1535 = vmatprep.subr.mxu0 %v1472
  %1536 = vmatpush1.msra.mxu0 %v1471
  %1537 = vmatprep.subr.mxu0 %v1476
  %1538 = vmatpush1.msra.mxu0 %v1475
  %1539 = vmatprep.subr.mxu0 %v1480
  %1540 = vmatpush1.msra.mxu0 %v1479
  %1541 = vmatprep.subr.mxu0 %v1484
  %1542 = vmatpush1.msra.mxu0 %v1483
  %1543 = vmatprep.subr.mxu0 %v1488
  %1544 = vmatpush1.msra.mxu0 %v1487
  %1545 = vmatprep.subr.mxu0 %v1492
  %1546 = vmatpush1.msra.mxu0 %v1491
  %1547 = vmatprep.subr.mxu0 %v1496
  %1548 = vmatpush1.msra.mxu0 %v1495
  %1549 = vmatprep.subr.mxu0 %v1500
  %1550 = vmatpush1.msra.mxu0 %v1499
  %1551 = vmatprep.subr.mxu0 %v1504
  %1552 = vmatpush1.msra.mxu0 %v1503
  %1553 = vmatprep.subr.mxu0 %v1508
  %1554 = vmatpush1.msra.mxu0 %v1507
  %1555 = vmatprep.subr.mxu0 %v1512
  %1556 = vmatpush1.msra.mxu0 %v1511
  %1557 = vmatprep.subr.mxu0 %v1516
  %1558 = vmatpush1.msra.mxu0 %v1515
  %1559 = vmatprep.subr.mxu0 %v1520
  %1560 = vmatpush1.msra.mxu0 %v1519
  %1561 = vmatprep.subr.mxu0 %v1524
  %1562 = vmatpush1.msra.mxu0 %v1523
  %1563 = vmatprep.subr.mxu0 %v1528
  %1564 = vmatpush1.msra.mxu0 %v1527
  %1565 = vmatprep.subr.mxu0 %v1532
  %1566 = vmatpush1.msra.mxu0 %v1531
  %1567 = vmatprep.subr.mxu0 0.0
  %1568 = vmatpush1.msra.mxu0 0.0
  %1569 = vmatprep.subr.mxu0 0.0
  %1570 = vmatpush1.msra.mxu0 0.0
  %1571 = vmatprep.subr.mxu0 0.0
  %1572 = vmatpush1.msra.mxu0 0.0
  %1573 = vmatprep.subr.mxu0 0.0
  %1574 = vmatpush1.msra.mxu0 0.0
  %1575 = vmatprep.subr.mxu0 0.0
  %1576 = vmatpush1.msra.mxu0 0.0
  %1577 = vmatprep.subr.mxu0 0.0
  %1578 = vmatpush1.msra.mxu0 0.0
  %1579 = vmatprep.subr.mxu0 0.0
  %1580 = vmatpush1.msra.mxu0 0.0
  %1581 = vmatprep.subr.mxu0 0.0
  %1582 = vmatpush1.msra.mxu0 0.0
  %1583 = vmatprep.subr.mxu0 0.0
  %1584 = vmatpush1.msra.mxu0 0.0
  %1585 = vmatprep.subr.mxu0 0.0
  %1586 = vmatpush1.msra.mxu0 0.0
  %1587 = vmatprep.subr.mxu0 0.0
  %1588 = vmatpush1.msra.mxu0 0.0
  %1589 = vmatprep.subr.mxu0 0.0
  %1590 = vmatpush1.msra.mxu0 0.0
  %1591 = vmatprep.subr.mxu0 0.0
  %1592 = vmatpush1.msra.mxu0 0.0
  %1593 = vmatprep.subr.mxu0 0.0
  %1594 = vmatpush1.msra.mxu0 0.0
  %1595 = vmatprep.subr.mxu0 0.0
  %1596 = vmatpush1.msra.mxu0 0.0
  %1597 = vmatprep.subr.mxu0 0.0
  %1598 = vmatpush1.msra.mxu0 0.0
  %1599 = vmatprep.mubr.f32.mxu0 0.0
  %1600 = vmatmul.mubr.f32.gmra.mrb[0].mxu0 %v1463
  %v1601 = vpop.f32.mrb[0].mxu0
  %v1602 = vadd.f32 0.0, %v1601
  %v1603 = vpop.f32.mrb[0].mxu0
  %v1604 = vadd.f32 0.0, %v1603
  %1605 = vdwg.mxu0
  %1606 = vmatprep.subr.mxu0 %v1474
  %1607 = vmatpush1.msra.mxu0 %v1473
  %1608 = vmatprep.subr.mxu0 %v1478
  %1609 = vmatpush1.msra.mxu0 %v1477
  %1610 = vmatprep.subr.mxu0 %v1482
  %1611 = vmatpush1.msra.mxu0 %v1481
  %1612 = vmatprep.subr.mxu0 %v1486
  %1613 = vmatpush1.msra.mxu0 %v1485
  %1614 = vmatprep.subr.mxu0 %v1490
  %1615 = vmatpush1.msra.mxu0 %v1489
  %1616 = vmatprep.subr.mxu0 %v1494
  %1617 = vmatpush1.msra.mxu0 %v1493
  %1618 = vmatprep.subr.mxu0 %v1498
  %1619 = vmatpush1.msra.mxu0 %v1497
  %1620 = vmatprep.subr.mxu0 %v1502
  %1621 = vmatpush1.msra.mxu0 %v1501
  %1622 = vmatprep.subr.mxu0 %v1506
  %1623 = vmatpush1.msra.mxu0 %v1505
  %1624 = vmatprep.subr.mxu0 %v1510
  %1625 = vmatpush1.msra.mxu0 %v1509
  %1626 = vmatprep.subr.mxu0 %v1514
  %1627 = vmatpush1.msra.mxu0 %v1513
  %1628 = vmatprep.subr.mxu0 %v1518
  %1629 = vmatpush1.msra.mxu0 %v1517
  %1630 = vmatprep.subr.mxu0 %v1522
  %1631 = vmatpush1.msra.mxu0 %v1521
  %1632 = vmatprep.subr.mxu0 %v1526
  %1633 = vmatpush1.msra.mxu0 %v1525
  %1634 = vmatprep.subr.mxu0 %v1530
  %1635 = vmatpush1.msra.mxu0 %v1529
  %1636 = vmatprep.subr.mxu0 %v1534
  %1637 = vmatpush1.msra.mxu0 %v1533
  %1638 = vmatprep.subr.mxu0 0.0
  %1639 = vmatpush1.msra.mxu0 0.0
  %1640 = vmatprep.subr.mxu0 0.0
  %1641 = vmatpush1.msra.mxu0 0.0
  %1642 = vmatprep.subr.mxu0 0.0
  %1643 = vmatpush1.msra.mxu0 0.0
  %1644 = vmatprep.subr.mxu0 0.0
  %1645 = vmatpush1.msra.mxu0 0.0
  %1646 = vmatprep.subr.mxu0 0.0
  %1647 = vmatpush1.msra.mxu0 0.0
  %1648 = vmatprep.subr.mxu0 0.0
  %1649 = vmatpush1.msra.mxu0 0.0
  %1650 = vmatprep.subr.mxu0 0.0
  %1651 = vmatpush1.msra.mxu0 0.0
  %1652 = vmatprep.subr.mxu0 0.0
  %1653 = vmatpush1.msra.mxu0 0.0
  %1654 = vmatprep.subr.mxu0 0.0
  %1655 = vmatpush1.msra.mxu0 0.0
  %1656 = vmatprep.subr.mxu0 0.0
  %1657 = vmatpush1.msra.mxu0 0.0
  %1658 = vmatprep.subr.mxu0 0.0
  %1659 = vmatpush1.msra.mxu0 0.0
  %1660 = vmatprep.subr.mxu0 0.0
  %1661 = vmatpush1.msra.mxu0 0.0
  %1662 = vmatprep.subr.mxu0 0.0
  %1663 = vmatpush1.msra.mxu0 0.0
  %1664 = vmatprep.subr.mxu0 0.0
  %1665 = vmatpush1.msra.mxu0 0.0
  %1666 = vmatprep.subr.mxu0 0.0
  %1667 = vmatpush1.msra.mxu0 0.0
  %1668 = vmatprep.subr.mxu0 0.0
  %1669 = vmatpush1.msra.mxu0 0.0
  %1670 = vmatprep.mubr.f32.mxu0 0.0
  %1671 = vmatmul.mubr.f32.gmra.mrb[0].mxu0 %v1463
  %v1672 = vpop.f32.mrb[0].mxu0
  %v1673 = vadd.f32 0.0, %v1672
  %v1674 = vpop.f32.mrb[0].mxu0
  %v1675 = vadd.f32 0.0, %v1674
  %1676 = vdwg.mxu0
  %v1677 = vadd.f32 %v1467, %v1602
  %v1678 = vadd.f32 %v1468, %v1604
  %v1679 = vadd.f32 %v1469, %v1673
  %v1680 = vadd.f32 %v1470, %v1675
  %v1681 = vxor.u32 %v1677, 2147483648
  %v1682 = vmul.f32 %v1681, 1.442695
  %v1683 = vpow.pop %v1682
  %v1684 = vadd.f32 %v1683, 1.0
  %v1685 = vrcp.pop %v1684
  %v1686 = vmul.f32 1.0, %v1685
  %v1687 = vxor.u32 %v1678, 2147483648
  %v1688 = vmul.f32 %v1687, 1.442695
  %v1689 = vpow.pop %v1688
  %v1690 = vadd.f32 %v1689, 1.0
  %v1691 = vrcp.pop %v1690
  %v1692 = vmul.f32 1.0, %v1691
  %v1693 = vtanh.pop %v1679
  %v1694 = vxor.u32 %v1680, 2147483648
  %v1695 = vmul.f32 %v1694, 1.442695
  %v1696 = vpow.pop %v1695
  %v1697 = vadd.f32 %v1696, 1.0
  %v1698 = vrcp.pop %v1697
  %v1699 = vmul.f32 1.0, %v1698
  %v1700 = vmul.f32 %v1692, %v1461
  %v1701 = vmul.f32 %v1686, %v1693
  %v1702 = vadd.f32 %v1700, %v1701
  %v1703 = vtanh.pop %v1702
  %v1704 = vmul.f32 %v1699, %v1703
  %s1705 = scalar_lea.vmem %s2, 48
  %1706 = vst [vmem:[%s1705] sm:$0xff] %v1704
  %s1707 = scalar_lea.vmem %s0, 224
  %v1708 = vld [vmem:[%s1707] sm:$0xff]
  %v1709 = vld [vmem:[%s1707 + $0x8] sm:$0xff]
  %v1710 = vld [vmem:[%s1707 + $0x10] sm:$0xff]
  %v1711 = vld [vmem:[%s1707 + $0x18] sm:$0xff]
  %v1712 = vld [vmem:[%s1] sm:$0xff]
  %v1713 = vld [vmem:[%s1 + $0x8] sm:$0xff]
  %v1714 = vld [vmem:[%s1 + $0x10] sm:$0xff]
  %v1715 = vld [vmem:[%s1 + $0x18] sm:$0xff]
  %v1716 = vld [vmem:[%s1 + $0x20] sm:$0xff]
  %v1717 = vld [vmem:[%s1 + $0x28] sm:$0xff]
  %v1718 = vld [vmem:[%s1 + $0x30] sm:$0xff]
  %v1719 = vld [vmem:[%s1 + $0x38] sm:$0xff]
  %v1720 = vld [vmem:[%s1 + $0x40] sm:$0xff]
  %v1721 = vld [vmem:[%s1 + $0x48] sm:$0xff]
  %v1722 = vld [vmem:[%s1 + $0x50] sm:$0xff]
  %v1723 = vld [vmem:[%s1 + $0x58] sm:$0xff]
  %v1724 = vld [vmem:[%s1 + $0x60] sm:$0xff]
  %v1725 = vld [vmem:[%s1 + $0x68] sm:$0xff]
  %v1726 = vld [vmem:[%s1 + $0x70] sm:$0xff]
  %v1727 = vld [vmem:[%s1 + $0x78] sm:$0xff]
  %v1728 = vld [vmem:[%s1 + $0x80] sm:$0xff]
  %v1729 = vld [vmem:[%s1 + $0x88] sm:$0xff]
  %v1730 = vld [vmem:[%s1 + $0x90] sm:$0xff]
  %v1731 = vld [vmem:[%s1 + $0x98] sm:$0xff]
  %v1732 = vld [vmem:[%s1 + $0xa0] sm:$0xff]
  %v1733 = vld [vmem:[%s1 + $0xa8] sm:$0xff]
  %v1734 = vld [vmem:[%s1 + $0xb0] sm:$0xff]
  %v1735 = vld [vmem:[%s1 + $0xb8] sm:$0xff]
  %v1736 = vld [vmem:[%s1 + $0xc0] sm:$0xff]
  %v1737 = vld [vmem:[%s1 + $0xc8] sm:$0xff]
  %v1738 = vld [vmem:[%s1 + $0xd0] sm:$0xff]
  %v1739 = vld [vmem:[%s1 + $0xd8] sm:$0xff]
  %v1740 = vld [vmem:[%s1 + $0xe0] sm:$0xff]
  %v1741 = vld [vmem:[%s1 + $0xe8] sm:$0xff]
  %v1742 = vld [vmem:[%s1 + $0xf0] sm:$0xff]
  %v1743 = vld [vmem:[%s1 + $0xf8] sm:$0xff]
  %v1744 = vld [vmem:[%s1 + $0x100] sm:$0xff]
  %v1745 = vld [vmem:[%s1 + $0x108] sm:$0xff]
  %v1746 = vld [vmem:[%s1 + $0x110] sm:$0xff]
  %v1747 = vld [vmem:[%s1 + $0x118] sm:$0xff]
  %v1748 = vld [vmem:[%s1 + $0x120] sm:$0xff]
  %v1749 = vld [vmem:[%s1 + $0x128] sm:$0xff]
  %v1750 = vld [vmem:[%s1 + $0x130] sm:$0xff]
  %v1751 = vld [vmem:[%s1 + $0x138] sm:$0xff]
  %v1752 = vld [vmem:[%s1 + $0x140] sm:$0xff]
  %v1753 = vld [vmem:[%s1 + $0x148] sm:$0xff]
  %v1754 = vld [vmem:[%s1 + $0x150] sm:$0xff]
  %v1755 = vld [vmem:[%s1 + $0x158] sm:$0xff]
  %v1756 = vld [vmem:[%s1 + $0x160] sm:$0xff]
  %v1757 = vld [vmem:[%s1 + $0x168] sm:$0xff]
  %v1758 = vld [vmem:[%s1 + $0x170] sm:$0xff]
  %v1759 = vld [vmem:[%s1 + $0x178] sm:$0xff]
  %v1760 = vld [vmem:[%s1 + $0x180] sm:$0xff]
  %v1761 = vld [vmem:[%s1 + $0x188] sm:$0xff]
  %v1762 = vld [vmem:[%s1 + $0x190] sm:$0xff]
  %v1763 = vld [vmem:[%s1 + $0x198] sm:$0xff]
  %v1764 = vld [vmem:[%s1 + $0x1a0] sm:$0xff]
  %v1765 = vld [vmem:[%s1 + $0x1a8] sm:$0xff]
  %v1766 = vld [vmem:[%s1 + $0x1b0] sm:$0xff]
  %v1767 = vld [vmem:[%s1 + $0x1b8] sm:$0xff]
  %v1768 = vld [vmem:[%s1 + $0x1c0] sm:$0xff]
  %v1769 = vld [vmem:[%s1 + $0x1c8] sm:$0xff]
  %v1770 = vld [vmem:[%s1 + $0x1d0] sm:$0xff]
  %v1771 = vld [vmem:[%s1 + $0x1d8] sm:$0xff]
  %v1772 = vld [vmem:[%s1 + $0x1e0] sm:$0xff]
  %v1773 = vld [vmem:[%s1 + $0x1e8] sm:$0xff]
  %v1774 = vld [vmem:[%s1 + $0x1f0] sm:$0xff]
  %v1775 = vld [vmem:[%s1 + $0x1f8] sm:$0xff]
  %1776 = vmatprep.subr.mxu0 %v1713
  %1777 = vmatpush1.msra.mxu0 %v1712
  %1778 = vmatprep.subr.mxu0 %v1717
  %1779 = vmatpush1.msra.mxu0 %v1716
  %1780 = vmatprep.subr.mxu0 %v1721
  %1781 = vmatpush1.msra.mxu0 %v1720
  %1782 = vmatprep.subr.mxu0 %v1725
  %1783 = vmatpush1.msra.mxu0 %v1724
  %1784 = vmatprep.subr.mxu0 %v1729
  %1785 = vmatpush1.msra.mxu0 %v1728
  %1786 = vmatprep.subr.mxu0 %v1733
  %1787 = vmatpush1.msra.mxu0 %v1732
  %1788 = vmatprep.subr.mxu0 %v1737
  %1789 = vmatpush1.msra.mxu0 %v1736
  %1790 = vmatprep.subr.mxu0 %v1741
  %1791 = vmatpush1.msra.mxu0 %v1740
  %1792 = vmatprep.subr.mxu0 %v1745
  %1793 = vmatpush1.msra.mxu0 %v1744
  %1794 = vmatprep.subr.mxu0 %v1749
  %1795 = vmatpush1.msra.mxu0 %v1748
  %1796 = vmatprep.subr.mxu0 %v1753
  %1797 = vmatpush1.msra.mxu0 %v1752
  %1798 = vmatprep.subr.mxu0 %v1757
  %1799 = vmatpush1.msra.mxu0 %v1756
  %1800 = vmatprep.subr.mxu0 %v1761
  %1801 = vmatpush1.msra.mxu0 %v1760
  %1802 = vmatprep.subr.mxu0 %v1765
  %1803 = vmatpush1.msra.mxu0 %v1764
  %1804 = vmatprep.subr.mxu0 %v1769
  %1805 = vmatpush1.msra.mxu0 %v1768
  %1806 = vmatprep.subr.mxu0 %v1773
  %1807 = vmatpush1.msra.mxu0 %v1772
  %1808 = vmatprep.subr.mxu0 0.0
  %1809 = vmatpush1.msra.mxu0 0.0
  %1810 = vmatprep.subr.mxu0 0.0
  %1811 = vmatpush1.msra.mxu0 0.0
  %1812 = vmatprep.subr.mxu0 0.0
  %1813 = vmatpush1.msra.mxu0 0.0
  %1814 = vmatprep.subr.mxu0 0.0
  %1815 = vmatpush1.msra.mxu0 0.0
  %1816 = vmatprep.subr.mxu0 0.0
  %1817 = vmatpush1.msra.mxu0 0.0
  %1818 = vmatprep.subr.mxu0 0.0
  %1819 = vmatpush1.msra.mxu0 0.0
  %1820 = vmatprep.subr.mxu0 0.0
  %1821 = vmatpush1.msra.mxu0 0.0
  %1822 = vmatprep.subr.mxu0 0.0
  %1823 = vmatpush1.msra.mxu0 0.0
  %1824 = vmatprep.subr.mxu0 0.0
  %1825 = vmatpush1.msra.mxu0 0.0
  %1826 = vmatprep.subr.mxu0 0.0
  %1827 = vmatpush1.msra.mxu0 0.0
  %1828 = vmatprep.subr.mxu0 0.0
  %1829 = vmatpush1.msra.mxu0 0.0
  %1830 = vmatprep.subr.mxu0 0.0
  %1831 = vmatpush1.msra.mxu0 0.0
  %1832 = vmatprep.subr.mxu0 0.0
  %1833 = vmatpush1.msra.mxu0 0.0
  %1834 = vmatprep.subr.mxu0 0.0
  %1835 = vmatpush1.msra.mxu0 0.0
  %1836 = vmatprep.subr.mxu0 0.0
  %1837 = vmatpush1.msra.mxu0 0.0
  %1838 = vmatprep.subr.mxu0 0.0
  %1839 = vmatpush1.msra.mxu0 0.0
  %1840 = vmatprep.mubr.f32.mxu0 0.0
  %1841 = vmatmul.mubr.f32.gmra.mrb[0].mxu0 %v1704
  %v1842 = vpop.f32.mrb[0].mxu0
  %v1843 = vadd.f32 0.0, %v1842
  %v1844 = vpop.f32.mrb[0].mxu0
  %v1845 = vadd.f32 0.0, %v1844
  %1846 = vdwg.mxu0
  %1847 = vmatprep.subr.mxu0 %v1715
  %1848 = vmatpush1.msra.mxu0 %v1714
  %1849 = vmatprep.subr.mxu0 %v1719
  %1850 = vmatpush1.msra.mxu0 %v1718
  %1851 = vmatprep.subr.mxu0 %v1723
  %1852 = vmatpush1.msra.mxu0 %v1722
  %1853 = vmatprep.subr.mxu0 %v1727
  %1854 = vmatpush1.msra.mxu0 %v1726
  %1855 = vmatprep.subr.mxu0 %v1731
  %1856 = vmatpush1.msra.mxu0 %v1730
  %1857 = vmatprep.subr.mxu0 %v1735
  %1858 = vmatpush1.msra.mxu0 %v1734
  %1859 = vmatprep.subr.mxu0 %v1739
  %1860 = vmatpush1.msra.mxu0 %v1738
  %1861 = vmatprep.subr.mxu0 %v1743
  %1862 = vmatpush1.msra.mxu0 %v1742
  %1863 = vmatprep.subr.mxu0 %v1747
  %1864 = vmatpush1.msra.mxu0 %v1746
  %1865 = vmatprep.subr.mxu0 %v1751
  %1866 = vmatpush1.msra.mxu0 %v1750
  %1867 = vmatprep.subr.mxu0 %v1755
  %1868 = vmatpush1.msra.mxu0 %v1754
  %1869 = vmatprep.subr.mxu0 %v1759
  %1870 = vmatpush1.msra.mxu0 %v1758
  %1871 = vmatprep.subr.mxu0 %v1763
  %1872 = vmatpush1.msra.mxu0 %v1762
  %1873 = vmatprep.subr.mxu0 %v1767
  %1874 = vmatpush1.msra.mxu0 %v1766
  %1875 = vmatprep.subr.mxu0 %v1771
  %1876 = vmatpush1.msra.mxu0 %v1770
  %1877 = vmatprep.subr.mxu0 %v1775
  %1878 = vmatpush1.msra.mxu0 %v1774
  %1879 = vmatprep.subr.mxu0 0.0
  %1880 = vmatpush1.msra.mxu0 0.0
  %1881 = vmatprep.subr.mxu0 0.0
  %1882 = vmatpush1.msra.mxu0 0.0
  %1883 = vmatprep.subr.mxu0 0.0
  %1884 = vmatpush1.msra.mxu0 0.0
  %1885 = vmatprep.subr.mxu0 0.0
  %1886 = vmatpush1.msra.mxu0 0.0
  %1887 = vmatprep.subr.mxu0 0.0
  %1888 = vmatpush1.msra.mxu0 0.0
  %1889 = vmatprep.subr.mxu0 0.0
  %1890 = vmatpush1.msra.mxu0 0.0
  %1891 = vmatprep.subr.mxu0 0.0
  %1892 = vmatpush1.msra.mxu0 0.0
  %1893 = vmatprep.subr.mxu0 0.0
  %1894 = vmatpush1.msra.mxu0 0.0
  %1895 = vmatprep.subr.mxu0 0.0
  %1896 = vmatpush1.msra.mxu0 0.0
  %1897 = vmatprep.subr.mxu0 0.0
  %1898 = vmatpush1.msra.mxu0 0.0
  %1899 = vmatprep.subr.mxu0 0.0
  %1900 = vmatpush1.msra.mxu0 0.0
  %1901 = vmatprep.subr.mxu0 0.0
  %1902 = vmatpush1.msra.mxu0 0.0
  %1903 = vmatprep.subr.mxu0 0.0
  %1904 = vmatpush1.msra.mxu0 0.0
  %1905 = vmatprep.subr.mxu0 0.0
  %1906 = vmatpush1.msra.mxu0 0.0
  %1907 = vmatprep.subr.mxu0 0.0
  %1908 = vmatpush1.msra.mxu0 0.0
  %1909 = vmatprep.subr.mxu0 0.0
  %1910 = vmatpush1.msra.mxu0 0.0
  %1911 = vmatprep.mubr.f32.mxu0 0.0
  %1912 = vmatmul.mubr.f32.gmra.mrb[0].mxu0 %v1704
  %v1913 = vpop.f32.mrb[0].mxu0
  %v1914 = vadd.f32 0.0, %v1913
  %v1915 = vpop.f32.mrb[0].mxu0
  %v1916 = vadd.f32 0.0, %v1915
  %1917 = vdwg.mxu0
  %v1918 = vadd.f32 %v1708, %v1843
  %v1919 = vadd.f32 %v1709, %v1845
  %v1920 = vadd.f32 %v1710, %v1914
  %v1921 = vadd.f32 %v1711, %v1916
  %v1922 = vxor.u32 %v1918, 2147483648
  %v1923 = vmul.f32 %v1922, 1.442695
  %v1924 = vpow.pop %v1923
  %v1925 = vadd.f32 %v1924, 1.0
  %v1926 = vrcp.pop %v1925
  %v1927 = vmul.f32 1.0, %v1926
  %v1928 = vxor.u32 %v1919, 2147483648
  %v1929 = vmul.f32 %v1928, 1.442695
  %v1930 = vpow.pop %v1929
  %v1931 = vadd.f32 %v1930, 1.0
  %v1932 = vrcp.pop %v1931
  %v1933 = vmul.f32 1.0, %v1932
  %v1934 = vtanh.pop %v1920
  %v1935 = vxor.u32 %v1921, 2147483648
  %v1936 = vmul.f32 %v1935, 1.442695
  %v1937 = vpow.pop %v1936
  %v1938 = vadd.f32 %v1937, 1.0
  %v1939 = vrcp.pop %v1938
  %v1940 = vmul.f32 1.0, %v1939
  %v1941 = vmul.f32 %v1933, %v1702
  %v1942 = vmul.f32 %v1927, %v1934
  %v1943 = vadd.f32 %v1941, %v1942
  %v1944 = vtanh.pop %v1943
  %v1945 = vmul.f32 %v1940, %v1944
  %s1946 = scalar_lea.vmem %s2, 56
  %1947 = vst [vmem:[%s1946] sm:$0xff] %v1945
  %1948 = vst [vmem:[#allocation2] sm:$0xff] %v1945
  %1949 = vst [vmem:[#allocation3] sm:$0xff] %v1943
  // Predicated region
  $region14: #{seq2seq_forward.2} parent=0 // pred_check
    %p1950 = pneg %p14
  $region15: #{seq2seq_forward.2} parent=0 // pred_check_branch
    %1952 = sbr.rel (%p1950) target = $region17
  $region16: #{seq2seq_forward.2} parent=0 // pred_region
    %v1953 = vld [vmem:[#allocation2] sm:$0xff]
    %1954 = vst [vmem:[%s3] sm:$0xff] %v1953
    %v1955 = vld [vmem:[#allocation3] sm:$0xff]
    %1956 = vst [vmem:[%s4] sm:$0xff] %v1955
  $region17: #{seq2seq_forward.2} parent=0 // pred_fallthru
    _
  // Predicated region
  $region18: #{seq2seq_forward.2} parent=0 // pred_check
    _
  $region19: #{seq2seq_forward.2} parent=0 // pred_check_branch
    %1958 = sbr.rel (0) target = $region21
  $region20: #{seq2seq_forward.2} parent=0 // pred_region
    _
  $region21: #{seq2seq_forward.2} parent=0 // pred_fallthru
    _
  // Predicated region
  $region22: #{seq2seq_forward.2} parent=0 // pred_check
    _
  $region23: #{seq2seq_forward.2} parent=0 // pred_check_branch
    %1960 = sbr.rel (0) target = $region25
  $region24: #{seq2seq_forward.2} parent=0 // pred_region
    _
  $region25: #{seq2seq_forward.2} parent=0 // pred_fallthru
    _
  // Predicated region
  $region26: #{seq2seq_forward.2} parent=0 // pred_check
    _
  $region27: #{seq2seq_forward.2} parent=0 // pred_check_branch
    %1962 = sbr.rel (0) target = $region29
  $region28: #{seq2seq_forward.2} parent=0 // pred_region
    _
  $region29: #{seq2seq_forward.2} parent=0 // pred_fallthru
    _
  // Predicated region
  $region30: #{seq2seq_forward.2} parent=0 // pred_check
    _
  $region31: #{seq2seq_forward.2} parent=0 // pred_check_branch
    %1964 = sbr.rel (0) target = $region33
  $region32: #{seq2seq_forward.2} parent=0 // pred_region
    _
  $region33: #{seq2seq_forward.2} parent=0 // pred_fallthru
    _
  // Predicated region
  $region34: #{seq2seq_forward.2} parent=0 // pred_check
    _
  $region35: #{seq2seq_forward.2} parent=0 // pred_check_branch
    %1966 = sbr.rel (0) target = $region37
  $region36: #{seq2seq_forward.2} parent=0 // pred_region
    _
  $region37: #{seq2seq_forward.2} parent=0 // pred_fallthru
    _
  // Predicated region
  $region38: #{seq2seq_forward.2} parent=0 // pred_check
    _
  $region39: #{seq2seq_forward.2} parent=0 // pred_check_branch
    %1968 = sbr.rel (0) target = $region41
  $region40: #{seq2seq_forward.2} parent=0 // pred_region
    _
  $region41: #{seq2seq_forward.2} parent=0 // pred_fallthru
    _

</llo_original>
